<compile_context>
chip_gen: v5e
topology: v5e:2x2
jax: 0.10.0
libtpu: 0.0.40
codegen_flags: <defaults>
</compile_context>

<pallas_src>
import functools

import jax
import jax.numpy as jnp
from jax.experimental import pallas as pl
from jax.experimental.pallas import tpu as pltpu

MXU_DTYPE = jnp.bfloat16          # MXU-input dtype for the N x N  L_hat @ T matmuls
VMEM_LIMIT = 32 * 1024 * 1024     # safe on v5e/v6e/v7x; actual footprint is a few MiB


# ----------------------------------------------------------------------------
# Small helpers
# ----------------------------------------------------------------------------
def _round_up(v, m):
    return ((v + m - 1) // m) * m


def _pad_axis(a, axis, size):
    pad = size - a.shape[axis]
    if pad <= 0:
        return a
    widths = [(0, 0)] * a.ndim
    widths[axis] = (0, pad)
    return jnp.pad(a, widths)


def _pick_tiles(n_pad):
    """(tm, tk) for a zero-padded node count n_pad.
    Small graphs: one tile.  Large graphs: 256/512-aligned tiles (bf16 sublane
    packing + full MXU), with tm capped so the row ('parallel') axis has >=2
    tiles for megacore sharding."""
    if n_pad <= 256:
        return n_pad, n_pad
    tk = 512 if n_pad % 512 == 0 else 256
    tm = 512 if (n_pad % 512 == 0 and n_pad >= 1024) else 256
    if n_pad // tm < 2:
        tm = max(n_pad // 2, 16)
    return tm, tk


def _pair_pool_matrix(tm):
    """(tm//2, tm) matrix averaging consecutive node pairs (0.5 on cols 2r, 2r+1)."""
    r = jax.lax.broadcasted_iota(jnp.int32, (tm // 2, tm), 0)
    c = jax.lax.broadcasted_iota(jnp.int32, (tm // 2, tm), 1)
    return jnp.where(jnp.logical_or(c == 2 * r, c == 2 * r + 1),
                     0.5, 0.0).astype(jnp.float32)


# ----------------------------------------------------------------------------
# Pallas kernels (hot path)
# ----------------------------------------------------------------------------
def cheb_recur_kernel(*refs, first):
    """T_new = L @ T_prev                 (first=True : T_1)
       T_new = 2 * L @ T_prev - T_prev2   (first=False: T_k, k >= 2)
    Tiled over (row tiles, L column tiles); f32 accumulator in VMEM scratch.
    Dual output: f32 copy (recurrence/projection reads) + bf16 copy (next
    call's MXU contraction stream)."""
    if first:
        l_ref, tc_ref, o32_ref, o16_ref, acc_ref = refs
        tm2_ref = None
    else:
        l_ref, tc_ref, tm2_ref, o32_ref, o16_ref, acc_ref = refs
    kk = pl.program_id(1)

    @pl.when(kk == 0)
    def _init():
        acc_ref[...] = jnp.zeros_like(acc_ref)

    acc_ref[...] += jnp.dot(l_ref[...], tc_ref[...],
                            preferred_element_type=jnp.float32)

    @pl.when(kk == pl.num_programs(1) - 1)
    def _finish():
        if first:
            t_new = acc_ref[...]
        else:
            t_new = 2.0 * acc_ref[...] - tm2_ref[...]
        o32_ref[...] = t_new
        o16_ref[...] = t_new.astype(MXU_DTYPE)


def cheb_final_kernel(*refs, K, apply_relu, pair_pool):
    """Fused epilogue: computes the last Chebyshev order T_{K-1} while reducing
    over L column tiles, then projects sum_k T_k @ W_k + b, applies ReLU and
    (optionally) the consecutive-pair mean-pool coarsening — all gated on the
    last reduction step."""
    l_ref, tc_ref = refs[0], refs[1]
    trow_refs = refs[2:2 + (K - 1)]                   # T_0 .. T_{K-2} row tiles (f32)
    idx = 2 + (K - 1)
    if pair_pool:
        pool_ref = refs[idx]
        idx += 1
    w_ref, b_ref, o_ref, acc_ref = refs[idx:idx + 4]
    kk = pl.program_id(1)

    @pl.when(kk == 0)
    def _init():
        acc_ref[...] = jnp.zeros_like(acc_ref)

    acc_ref[...] += jnp.dot(l_ref[...], tc_ref[...],
                            preferred_element_type=jnp.float32)

    @pl.when(kk == pl.num_programs(1) - 1)
    def _finish():
        if K == 2:
            t_last = acc_ref[...]
        else:
            t_last = 2.0 * acc_ref[...] - trow_refs[K - 3][...]
        out = jnp.dot(t_last, w_ref[K - 1], preferred_element_type=jnp.float32)
        for k in range(K - 1):
            out += jnp.dot(trow_refs[k][...], w_ref[k],
                           preferred_element_type=jnp.float32)
        out = out + b_ref[...]
        if apply_relu:
            out = jnp.maximum(out, 0.0)
        if pair_pool:
            # Mean over consecutive node pairs via the constant pooling matrix.
            out = jnp.dot(pool_ref[...], out, preferred_element_type=jnp.float32)
        o_ref[...] = out


def pool_fc_logsoftmax_kernel(pool_ref, x_ref, w_ref, b_ref, o_ref, acc_ref):
    """global_mean_pool (tiled matmul reduction) -> Linear -> log_softmax(dim=1)."""
    kk = pl.program_id(0)

    @pl.when(kk == 0)
    def _init():
        acc_ref[...] = jnp.zeros_like(acc_ref)

    acc_ref[...] += jnp.dot(pool_ref[...], x_ref[...],
                            preferred_element_type=jnp.float32)

    @pl.when(kk == pl.num_programs(0) - 1)
    def _finish():
        logits = jnp.dot(acc_ref[...], w_ref[...],
                         preferred_element_type=jnp.float32) + b_ref[...]
        m = jnp.max(logits, axis=1, keepdims=True)
        z = logits - m
        lse = jnp.log(jnp.sum(jnp.exp(z), axis=1, keepdims=True))
        o_ref[...] = z - lse


# ----------------------------------------------------------------------------
# Kernel wrappers
# ----------------------------------------------------------------------------
def cheb_conv(L, x, w, b, *, apply_relu, pair_pool):
    """ChebConv (normalization='sym', lambda_max=2): out = sum_k T_k(L_hat) W_k + b.
    L: [n,n] f32 scaled Laplacian; x: [n,F] f32 (natural width, no lane padding);
    w: [K,F,H] f32; b: [H] f32.  Returns [n,H] (or [n//2,H] with pair_pool)."""
    n, F = x.shape
    K, F2, H = w.shape
    assert F2 == F and K >= 2, "ChebConv kernel supports K >= 2"
    if pair_pool:
        assert n % 2 == 0, "pairwise coarsening needs an even node count"

    n_pad = _round_up(n, 16) if n <= 256 else _round_up(n, 256)
    tm, tk = _pick_tiles(n_pad)
    assert n_pad % tm == 0 and n_pad % tk == 0
    if pair_pool:
        assert tm % 2 == 0

    # Zero padding is exact for the L @ T recurrence; padded output rows are
    # sliced away before returning.
    L16 = _pad_axis(_pad_axis(L, 0, n_pad), 1, n_pad).astype(MXU_DTYPE)
    x32 = _pad_axis(x, 0, n_pad)
    x16 = x32.astype(MXU_DTYPE)

    grid = (n_pad // tm, n_pad // tk)
    l_spec = pl.BlockSpec((tm, tk), lambda i, k: (i, k))
    contr_spec = pl.BlockSpec((tk, F), lambda i, k: (k, 0))   # bf16 re-streamed
    row_spec = pl.BlockSpec((tm, F), lambda i, k: (i, 0))     # f32, fetched once/row
    cparams = pltpu.CompilerParams(
        dimension_semantics=("parallel", "arbitrary"),
        vmem_limit_bytes=VMEM_LIMIT)

    # --- T_1 .. T_{K-2}: tiled recurrence calls (f32 + bf16 dual carries). ---
    Ts = [x32]          # f32 copies (T_0 .. T_{K-2})
    contr = x16         # bf16 contraction stream for the next call
    for order in range(1, K - 1):
        first = order == 1
        operands = [L16, contr] if first else [L16, contr, Ts[-2]]
        in_specs = [l_spec, contr_spec] if first else [l_spec, contr_spec, row_spec]
        t32, t16 = pl.pallas_call(
            functools.partial(cheb_recur_kernel, first=first),
            out_shape=(jax.ShapeDtypeStruct((n_pad, F), jnp.float32),
                       jax.ShapeDtypeStruct((n_pad, F), MXU_DTYPE)),
            grid=grid,
            in_specs=in_specs,
            out_specs=[row_spec, row_spec],
            scratch_shapes=[pltpu.VMEM((tm, F), jnp.float32)],
            compiler_params=cparams,
            cost_estimate=pl.CostEstimate(
                flops=int(2 * n_pad * n_pad * F),
                transcendentals=0,
                bytes_accessed=int(n_pad * n_pad * 2                 # L (bf16)
                                   + (n_pad // tm) * n_pad * F * 2   # T re-stream (bf16)
                                   + (0 if first else n_pad * F * 4) # T_{k-2} rows
                                   + n_pad * F * 6)),                # f32 + bf16 stores
        )(*operands)
        Ts.append(t32)
        contr = t16

    # --- Fused: last order + projection (+ReLU) (+pair-mean coarsening). ---
    out_rows = n_pad // 2 if pair_pool else n_pad
    out_tm = tm // 2 if pair_pool else tm

    in_specs = [l_spec, contr_spec] + [row_spec] * (K - 1)
    operands = [L16, contr] + Ts
    if pair_pool:
        in_specs.append(pl.BlockSpec((tm // 2, tm), lambda i, k: (0, 0)))
        operands.append(_pair_pool_matrix(tm))
    in_specs += [pl.BlockSpec((K, F, H), lambda i, k: (0, 0, 0)),
                 pl.BlockSpec((1, H), lambda i, k: (0, 0))]
    operands += [w, b.reshape(1, H)]

    out = pl.pallas_call(
        functools.partial(cheb_final_kernel, K=K,
                          apply_relu=apply_relu, pair_pool=pair_pool),
        out_shape=jax.ShapeDtypeStruct((out_rows, H), jnp.float32),
        grid=grid,
        in_specs=in_specs,
        out_specs=pl.BlockSpec((out_tm, H), lambda i, k: (i, 0)),
        scratch_shapes=[pltpu.VMEM((tm, F), jnp.float32)],
        compiler_params=cparams,
        cost_estimate=pl.CostEstimate(
            flops=int(2 * n_pad * n_pad * F + 2 * n_pad * K * F * H),
            transcendentals=0,
            bytes_accessed=int(n_pad * n_pad * 2
                               + (n_pad // tm) * n_pad * F * 2
                               + (K - 1) * n_pad * F * 4
                               + K * F * H * 4
                               + out_rows * H * 4)),
    )(*operands)

    real_rows = n // 2 if pair_pool else n
    return out[:real_rows]


def pool_fc_logsoftmax(pool_mat, x, w, b):
    """global_mean_pool (as tiled matmul) -> Linear -> log_softmax(dim=1)."""
    B, nc = pool_mat.shape
    H = x.shape[1]
    C = w.shape[1]
    tnk = nc if nc <= 1024 else 512
    nc_pad = _round_up(nc, tnk)
    pool_p = _pad_axis(pool_mat, 1, nc_pad)   # zero columns -> exact
    x_p = _pad_axis(x, 0, nc_pad)
    grid = (nc_pad // tnk,)
    return pl.pallas_call(
        pool_fc_logsoftmax_kernel,
        out_shape=jax.ShapeDtypeStruct((B, C), jnp.float32),
        grid=grid,
        in_specs=[pl.BlockSpec((B, tnk), lambda k: (0, k)),
                  pl.BlockSpec((tnk, H), lambda k: (k, 0)),
                  pl.BlockSpec((H, C), lambda k: (0, 0)),
                  pl.BlockSpec((1, C), lambda k: (0, 0))],
        out_specs=pl.BlockSpec((B, C), lambda k: (0, 0)),
        scratch_shapes=[pltpu.VMEM((B, H), jnp.float32)],
        compiler_params=pltpu.CompilerParams(
            dimension_semantics=("arbitrary",),
            vmem_limit_bytes=VMEM_LIMIT),
    )(pool_p, x_p, w, b.reshape(1, -1))


# ----------------------------------------------------------------------------
# Graph glue (structure bookkeeping, plain JAX, O(N^2))
# ----------------------------------------------------------------------------
def edge_index_to_dense_adj(edge_index, n):
    src, dst = edge_index
    adj = jnp.zeros((n, n), jnp.float32).at[src, dst].set(1.0)
    return adj * (1.0 - jnp.eye(n, dtype=jnp.float32))  # remove self-loops


def scaled_laplacian(adj):
    # PyG ChebConv, normalization='sym', default lambda_max = 2.0:
    #   L_hat = (2/lambda_max) * (I - D^-1/2 A D^-1/2) - I = -D^-1/2 A D^-1/2
    deg = adj.sum(axis=1)
    dinv = jnp.where(deg > 0, 1.0 / jnp.sqrt(deg), 0.0)
    return -(dinv[:, None] * adj * dinv[None, :])


def coarsen_pairwise(adj, n):
    # TODO(synk): exact graclus coarsening is a data-dependent greedy matching with
    # no clean Pallas equivalent; deterministic pairing of consecutive nodes with
    # mean feature pooling is used as the coarsening stand-in.
    nc = n // 2
    adj_c = adj.reshape(nc, 2, nc, 2).sum(axis=(1, 3))   # == S @ adj @ S^T, O(N^2)
    adj_c = jnp.clip(adj_c, 0.0, 1.0) * (1.0 - jnp.eye(nc, dtype=jnp.float32))
    clusters_idx = 2 * jnp.arange(nc)                    # representative node per cluster
    return adj_c, clusters_idx


# ----------------------------------------------------------------------------
# Model forward (kernels for compute, JAX for graph bookkeeping)
# ----------------------------------------------------------------------------
def graph_chebnet_forward(params, x, edge_index, batch, num_graphs):
    n = x.shape[0]
    adj = edge_index_to_dense_adj(edge_index, n)
    L1 = scaled_laplacian(adj)

    # conv1 + ReLU, with the pairwise mean-pool coarsening fused in the epilogue.
    # TODO(synk): a transposed T^T[F, n] layout (using L = L^T) would cut the
    # re-streamed bytes further; kept as a follow-up restructure.
    xc = cheb_conv(L1, x, params["w1"], params["b1"],
                   apply_relu=True, pair_pool=True)                  # [n//2, H]

    adj_c, clusters_idx = coarsen_pairwise(adj, n)
    L2 = scaled_laplacian(adj_c)

    # conv2 + ReLU on the coarsened graph.
    x2 = cheb_conv(L2, xc, params["w2"], params["b2"],
                   apply_relu=True, pair_pool=False)                 # [n//2, H]

    # global_mean_pool(x, batch[clusters_idx]) -> fc -> log_softmax.
    batch_c = batch[clusters_idx]
    M = (batch_c[None, :] == jnp.arange(num_graphs)[:, None]).astype(jnp.float32)
    pool_mat = M / jnp.maximum(M.sum(axis=1, keepdims=True), 1.0)
    return pool_fc_logsoftmax(pool_mat, x2, params["w_fc"], params["b_fc"])


# Pure-JAX reference of the same math (bf16 MXU inputs for L@T, f32 carries).
def reference_forward(params, x, edge_index, batch, num_graphs):
    hi = jax.lax.Precision.HIGHEST

    def mxu_dot(a, b):
        return jnp.dot(a.astype(MXU_DTYPE), b.astype(MXU_DTYPE),
                       preferred_element_type=jnp.float32)

    def cheb_ref(L, xx, w, b, relu):
        K = w.shape[0]
        Ts = [xx]
        if K >= 2:
            Ts.append(mxu_dot(L, Ts[-1]))
        for _ in range(2, K):
            Ts.append(2.0 * mxu_dot(L, Ts[-1]) - Ts[-2])
        acc = sum(jnp.dot(t, wk, preferred_element_type=jnp.float32, precision=hi)
                  for t, wk in zip(Ts, w))
        acc = acc + b[None, :]
        return jnp.maximum(acc, 0.0) if relu else acc

    n = x.shape[0]
    adj = edge_index_to_dense_adj(edge_index, n)
    L1 = scaled_laplacian(adj)
    x1 = cheb_ref(L1, x, params["w1"], params["b1"], True)
    xc = (x1[0::2] + x1[1::2]) * 0.5
    adj_c, clusters_idx = coarsen_pairwise(adj, n)
    L2 = scaled_laplacian(adj_c)
    x2 = cheb_ref(L2, xc, params["w2"], params["b2"], True)
    batch_c = batch[clusters_idx]
    M = (batch_c[None, :] == jnp.arange(num_graphs)[:, None]).astype(jnp.float32)
    pool_mat = M / jnp.maximum(M.sum(axis=1, keepdims=True), 1.0)
    pooled = jnp.dot(pool_mat, x2, precision=hi)
    logits = jnp.dot(pooled, params["w_fc"], precision=hi) + params["b_fc"][None, :]
    return jax.nn.log_softmax(logits, axis=1)


# ----------------------------------------------------------------------------
# Deterministic parameter init (glorot-uniform weights, zero biases, like PyG)
# ----------------------------------------------------------------------------
def glorot(key, shape):
    fan_in, fan_out = shape[-2], shape[-1]
    limit = (6.0 / (fan_in + fan_out)) ** 0.5
    return jax.random.uniform(key, shape, jnp.float32, -limit, limit)


if __name__ == "__main__":
    key = jax.random.PRNGKey(0)
    B = 2                 # graphs in the batch
    nodes_per_graph = 16
    N = B * nodes_per_graph
    F_in, H, C, K = 16, 32, 8, 3   # num_node_features, hidden_channels, num_classes, K

    k_x, k_w1, k_w2, k_fc = jax.random.split(key, 4)

    # Node features [N, F_in]
    x = jax.random.normal(k_x, (N, F_in), jnp.float32)

    # Deterministic undirected ring graph inside each graph of the batch.
    offsets = jnp.repeat(jnp.arange(B) * nodes_per_graph, nodes_per_graph)
    local = jnp.tile(jnp.arange(nodes_per_graph), B)
    src = local + offsets
    dst = (local + 1) % nodes_per_graph + offsets
    edge_index = jnp.stack([jnp.concatenate([src, dst]),
                            jnp.concatenate([dst, src])]).astype(jnp.int32)
    batch = jnp.repeat(jnp.arange(B), nodes_per_graph).astype(jnp.int32)

    params = {
        "w1": glorot(k_w1, (K, F_in, H)),
        "b1": jnp.zeros((H,), jnp.float32),
        "w2": glorot(k_w2, (K, H, H)),
        "b2": jnp.zeros((H,), jnp.float32),
        "w_fc": glorot(k_fc, (H, C)),
        "b_fc": jnp.zeros((C,), jnp.float32),
    }

    fwd = jax.jit(functools.partial(graph_chebnet_forward, num_graphs=B))
    out = jax.block_until_ready(fwd(params, x, edge_index, batch))

    ref = jax.block_until_ready(reference_forward(params, x, edge_index, batch, B))
    assert out.shape == (B, C)
    assert jnp.allclose(out, ref, atol=2e-3, rtol=2e-3), "mismatch vs JAX reference"

    print("KERNEL_OK")
</pallas_src>

<mosaic_0001>
module attributes {stable_mosaic.version = 11 : i64} {
  func.func @cheb_recur_kernel(%arg0: i32, %arg1: i32, %arg2: memref<32x32xbf16, #tpu.memory_space<vmem>>, %arg3: memref<32x16xbf16, #tpu.memory_space<vmem>>, %arg4: memref<32x16xf32, #tpu.memory_space<vmem>>, %arg5: memref<32x16xbf16, #tpu.memory_space<vmem>>, %arg6: memref<32x16xf32, #tpu.memory_space<vmem>>) attributes {dimension_semantics = [#tpu.dimension_semantics<parallel>, #tpu.dimension_semantics<arbitrary>], iteration_bounds = array<i64: 1, 1>, scalar_prefetch = 0 : i64, scratch_operands = 1 : i64, tpu.core_type = #tpu.core_type<tc>, window_params = [{transform_indices = @transform_0, window_bounds = array<i64: 32, 32>}, {transform_indices = @transform_1, window_bounds = array<i64: 32, 16>}, {transform_indices = @transform_2, window_bounds = array<i64: 32, 16>}, {transform_indices = @transform_3, window_bounds = array<i64: 32, 16>}]} {
    %c0_i32 = arith.constant 0 : i32
    %0 = arith.cmpi eq, %arg1, %c0_i32 : i32
    %1 = arith.extui %0 : i1 to i32
    %c0_i32_0 = arith.constant 0 : i32
    %2 = arith.cmpi ne, %1, %c0_i32_0 : i32
    scf.if %2 {
      %cst_10 = arith.constant 0.000000e+00 : f32
      %12 = vector.broadcast %cst_10 : f32 to vector<32x16xf32>
      %c0_11 = arith.constant 0 : index
      %c0_12 = arith.constant 0 : index
      %13 = vector.load %arg6[%c0_11, %c0_12] : memref<32x16xf32, #tpu.memory_space<vmem>>, vector<32x16xf32>
      tpu.vector_store %arg6[%c0_11, %c0_12], %12 {strides = array<i32>} : memref<32x16xf32, #tpu.memory_space<vmem>>, vector<32x16xf32>,
    } else {
    }
    %c0 = arith.constant 0 : index
    %c0_1 = arith.constant 0 : index
    %3 = vector.load %arg6[%c0, %c0_1] : memref<32x16xf32, #tpu.memory_space<vmem>>, vector<32x16xf32>
    %c0_2 = arith.constant 0 : index
    %c0_3 = arith.constant 0 : index
    %4 = vector.load %arg2[%c0_2, %c0_3] : memref<32x32xbf16, #tpu.memory_space<vmem>>, vector<32x32xbf16>
    %c0_4 = arith.constant 0 : index
    %c0_5 = arith.constant 0 : index
    %5 = vector.load %arg3[%c0_4, %c0_5] : memref<32x16xbf16, #tpu.memory_space<vmem>>, vector<32x16xbf16>
    %cst = arith.constant dense<0.000000e+00> : vector<32x16xf32>
    %6 = tpu.matmul %4, %5, %cst {dimension_numbers = #tpu.dot_dimension_numbers<[1], [0], [0], [1], [0, 0, 1, 1], [], []>} : vector<32x32xbf16>, vector<32x16xbf16>, vector<32x16xf32> -> vector<32x16xf32>
    %7 = arith.addf %3, %6 : vector<32x16xf32>
    %c0_6 = arith.constant 0 : index
    %c0_7 = arith.constant 0 : index
    %8 = vector.load %arg6[%c0_6, %c0_7] : memref<32x16xf32, #tpu.memory_space<vmem>>, vector<32x16xf32>
    tpu.vector_store %arg6[%c0_6, %c0_7], %7 {strides = array<i32>} : memref<32x16xf32, #tpu.memory_space<vmem>>, vector<32x16xf32>,
    %c0_i32_8 = arith.constant 0 : i32
    %9 = arith.cmpi eq, %arg1, %c0_i32_8 : i32
    %10 = arith.extui %9 : i1 to i32
    %c0_i32_9 = arith.constant 0 : i32
    %11 = arith.cmpi ne, %10, %c0_i32_9 : i32
    scf.if %11 {
      %c0_10 = arith.constant 0 : index
      %c0_11 = arith.constant 0 : index
      %12 = vector.load %arg6[%c0_10, %c0_11] : memref<32x16xf32, #tpu.memory_space<vmem>>, vector<32x16xf32>
      %c0_12 = arith.constant 0 : index
      %c0_13 = arith.constant 0 : index
      %13 = vector.load %arg4[%c0_12, %c0_13] : memref<32x16xf32, #tpu.memory_space<vmem>>, vector<32x16xf32>
      tpu.vector_store %arg4[%c0_12, %c0_13], %12 {strides = array<i32>} : memref<32x16xf32, #tpu.memory_space<vmem>>, vector<32x16xf32>,
      %14 = arith.truncf %12 : vector<32x16xf32> to vector<32x16xbf16>
      %c0_14 = arith.constant 0 : index
      %c0_15 = arith.constant 0 : index
      %15 = vector.load %arg5[%c0_14, %c0_15] : memref<32x16xbf16, #tpu.memory_space<vmem>>, vector<32x16xbf16>
      tpu.vector_store %arg5[%c0_14, %c0_15], %14 {strides = array<i32>} : memref<32x16xbf16, #tpu.memory_space<vmem>>, vector<32x16xbf16>,
    } else {
    }
    return
  }
  func.func @transform_0(%arg0: i32, %arg1: i32) -> (i32, i32) {
    %c0_i32 = arith.constant 0 : i32
    return %arg0, %arg1 : i32, i32
  }
  func.func @transform_1(%arg0: i32, %arg1: i32) -> (i32, i32) {
    %c0_i32 = arith.constant 0 : i32
    %c0_i32_0 = arith.constant 0 : i32
    return %arg1, %c0_i32 : i32, i32
  }
  func.func @transform_2(%arg0: i32, %arg1: i32) -> (i32, i32) {
    %c0_i32 = arith.constant 0 : i32
    %c0_i32_0 = arith.constant 0 : i32
    return %arg0, %c0_i32 : i32, i32
  }
  func.func @transform_3(%arg0: i32, %arg1: i32) -> (i32, i32) {
    %c0_i32 = arith.constant 0 : i32
    %c0_i32_0 = arith.constant 0 : i32
    return %arg0, %c0_i32 : i32, i32
  }
}

module attributes {stable_mosaic.version = 11 : i64} {
  func.func @cheb_final_kernel(%arg0: i32, %arg1: i32, %arg2: memref<32x32xbf16, #tpu.memory_space<vmem>>, %arg3: memref<32x16xbf16, #tpu.memory_space<vmem>>, %arg4: memref<32x16xf32, #tpu.memory_space<vmem>>, %arg5: memref<32x16xf32, #tpu.memory_space<vmem>>, %arg6: memref<16x32xf32, #tpu.memory_space<vmem>>, %arg7: memref<3x16x32xf32, #tpu.memory_space<vmem>>, %arg8: memref<1x32xf32, #tpu.memory_space<vmem>>, %arg9: memref<16x32xf32, #tpu.memory_space<vmem>>, %arg10: memref<32x16xf32, #tpu.memory_space<vmem>>) attributes {dimension_semantics = [#tpu.dimension_semantics<parallel>, #tpu.dimension_semantics<arbitrary>], iteration_bounds = array<i64: 1, 1>, scalar_prefetch = 0 : i64, scratch_operands = 1 : i64, tpu.core_type = #tpu.core_type<tc>, window_params = [{transform_indices = @transform_0, window_bounds = array<i64: 32, 32>}, {transform_indices = @transform_1, window_bounds = array<i64: 32, 16>}, {transform_indices = @transform_2, window_bounds = array<i64: 32, 16>}, {transform_indices = @transform_3, window_bounds = array<i64: 32, 16>}, {pipeline_mode = #tpu.pipeline_mode<synchronous>, transform_indices = @transform_4, window_bounds = array<i64: 16, 32>}, {pipeline_mode = #tpu.pipeline_mode<synchronous>, transform_indices = @transform_5, window_bounds = array<i64: 3, 16, 32>}, {pipeline_mode = #tpu.pipeline_mode<synchronous>, transform_indices = @transform_6, window_bounds = array<i64: 1, 32>}, {transform_indices = @transform_7, window_bounds = array<i64: 16, 32>}]} {
    %c0_i32 = arith.constant 0 : i32
    %0 = arith.cmpi eq, %arg1, %c0_i32 : i32
    %1 = arith.extui %0 : i1 to i32
    %c0_i32_0 = arith.constant 0 : i32
    %2 = arith.cmpi ne, %1, %c0_i32_0 : i32
    scf.if %2 {
      %cst_10 = arith.constant 0.000000e+00 : f32
      %12 = vector.broadcast %cst_10 : f32 to vector<32x16xf32>
      %c0_11 = arith.constant 0 : index
      %c0_12 = arith.constant 0 : index
      %13 = vector.load %arg10[%c0_11, %c0_12] : memref<32x16xf32, #tpu.memory_space<vmem>>, vector<32x16xf32>
      tpu.vector_store %arg10[%c0_11, %c0_12], %12 {strides = array<i32>} : memref<32x16xf32, #tpu.memory_space<vmem>>, vector<32x16xf32>,
    } else {
    }
    %c0 = arith.constant 0 : index
    %c0_1 = arith.constant 0 : index
    %3 = vector.load %arg10[%c0, %c0_1] : memref<32x16xf32, #tpu.memory_space<vmem>>, vector<32x16xf32>
    %c0_2 = arith.constant 0 : index
    %c0_3 = arith.constant 0 : index
    %4 = vector.load %arg2[%c0_2, %c0_3] : memref<32x32xbf16, #tpu.memory_space<vmem>>, vector<32x32xbf16>
    %c0_4 = arith.constant 0 : index
    %c0_5 = arith.constant 0 : index
    %5 = vector.load %arg3[%c0_4, %c0_5] : memref<32x16xbf16, #tpu.memory_space<vmem>>, vector<32x16xbf16>
    %cst = arith.constant dense<0.000000e+00> : vector<32x16xf32>
    %6 = tpu.matmul %4, %5, %cst {dimension_numbers = #tpu.dot_dimension_numbers<[1], [0], [0], [1], [0, 0, 1, 1], [], []>} : vector<32x32xbf16>, vector<32x16xbf16>, vector<32x16xf32> -> vector<32x16xf32>
    %7 = arith.addf %3, %6 : vector<32x16xf32>
    %c0_6 = arith.constant 0 : index
    %c0_7 = arith.constant 0 : index
    %8 = vector.load %arg10[%c0_6, %c0_7] : memref<32x16xf32, #tpu.memory_space<vmem>>, vector<32x16xf32>
    tpu.vector_store %arg10[%c0_6, %c0_7], %7 {strides = array<i32>} : memref<32x16xf32, #tpu.memory_space<vmem>>, vector<32x16xf32>,
    %c0_i32_8 = arith.constant 0 : i32
    %9 = arith.cmpi eq, %arg1, %c0_i32_8 : i32
    %10 = arith.extui %9 : i1 to i32
    %c0_i32_9 = arith.constant 0 : i32
    %11 = arith.cmpi ne, %10, %c0_i32_9 : i32
    scf.if %11 {
      %c0_10 = arith.constant 0 : index
      %c0_11 = arith.constant 0 : index
      %12 = vector.load %arg10[%c0_10, %c0_11] : memref<32x16xf32, #tpu.memory_space<vmem>>, vector<32x16xf32>
      %cst_12 = arith.constant 2.000000e+00 : f32
      %13 = vector.broadcast %cst_12 : f32 to vector<32x16xf32>
      %14 = arith.mulf %13, %12 : vector<32x16xf32>
      %c0_13 = arith.constant 0 : index
      %c0_14 = arith.constant 0 : index
      %15 = vector.load %arg4[%c0_13, %c0_14] : memref<32x16xf32, #tpu.memory_space<vmem>>, vector<32x16xf32>
      %16 = arith.subf %14, %15 : vector<32x16xf32>
      %c2 = arith.constant 2 : index
      %c0_15 = arith.constant 0 : index
      %c0_16 = arith.constant 0 : index
      %17 = vector.load %arg7[%c2, %c0_15, %c0_16] : memref<3x16x32xf32, #tpu.memory_space<vmem>>, vector<1x16x32xf32>
      %18 = vector.shape_cast %17 : vector<1x16x32xf32> to vector<16x32xf32>
      %cst_17 = arith.constant dense<0.000000e+00> : vector<32x32xf32>
      %19 = tpu.matmul %16, %18, %cst_17 {dimension_numbers = #tpu.dot_dimension_numbers<[1], [0], [0], [1], [0, 0, 1, 1], [], []>} : vector<32x16xf32>, vector<16x32xf32>, vector<32x32xf32> -> vector<32x32xf32>
      %c0_18 = arith.constant 0 : index
      %c0_19 = arith.constant 0 : index
      %20 = vector.load %arg4[%c0_18, %c0_19] : memref<32x16xf32, #tpu.memory_space<vmem>>, vector<32x16xf32>
      %c0_20 = arith.constant 0 : index
      %c0_21 = arith.constant 0 : index
      %c0_22 = arith.constant 0 : index
      %21 = vector.load %arg7[%c0_20, %c0_21, %c0_22] : memref<3x16x32xf32, #tpu.memory_space<vmem>>, vector<1x16x32xf32>
      %22 = vector.shape_cast %21 : vector<1x16x32xf32> to vector<16x32xf32>
      %cst_23 = arith.constant dense<0.000000e+00> : vector<32x32xf32>
      %23 = tpu.matmul %20, %22, %cst_23 {dimension_numbers = #tpu.dot_dimension_numbers<[1], [0], [0], [1], [0, 0, 1, 1], [], []>} : vector<32x16xf32>, vector<16x32xf32>, vector<32x32xf32> -> vector<32x32xf32>
      %24 = arith.addf %19, %23 : vector<32x32xf32>
      %c0_24 = arith.constant 0 : index
      %c0_25 = arith.constant 0 : index
      %25 = vector.load %arg5[%c0_24, %c0_25] : memref<32x16xf32, #tpu.memory_space<vmem>>, vector<32x16xf32>
      %c1 = arith.constant 1 : index
      %c0_26 = arith.constant 0 : index
      %c0_27 = arith.constant 0 : index
      %26 = vector.load %arg7[%c1, %c0_26, %c0_27] : memref<3x16x32xf32, #tpu.memory_space<vmem>>, vector<1x16x32xf32>
      %27 = vector.shape_cast %26 : vector<1x16x32xf32> to vector<16x32xf32>
      %cst_28 = arith.constant dense<0.000000e+00> : vector<32x32xf32>
      %28 = tpu.matmul %25, %27, %cst_28 {dimension_numbers = #tpu.dot_dimension_numbers<[1], [0], [0], [1], [0, 0, 1, 1], [], []>} : vector<32x16xf32>, vector<16x32xf32>, vector<32x32xf32> -> vector<32x32xf32>
      %29 = arith.addf %24, %28 : vector<32x32xf32>
      %c0_29 = arith.constant 0 : index
      %c0_30 = arith.constant 0 : index
      %30 = vector.load %arg8[%c0_29, %c0_30] : memref<1x32xf32, #tpu.memory_space<vmem>>, vector<1x32xf32>
      %31 = vector.broadcast %30 : vector<1x32xf32> to vector<32x32xf32>
      %32 = arith.addf %29, %31 : vector<32x32xf32>
      %cst_31 = arith.constant 0.000000e+00 : f32
      %33 = vector.broadcast %cst_31 : f32 to vector<32x32xf32>
      %34 = arith.maximumf %32, %33 : vector<32x32xf32>
      %c0_32 = arith.constant 0 : index
      %c0_33 = arith.constant 0 : index
      %35 = vector.load %arg6[%c0_32, %c0_33] : memref<16x32xf32, #tpu.memory_space<vmem>>, vector<16x32xf32>
      %cst_34 = arith.constant dense<0.000000e+00> : vector<16x32xf32>
      %36 = tpu.matmul %35, %34, %cst_34 {dimension_numbers = #tpu.dot_dimension_numbers<[1], [0], [0], [1], [0, 0, 1, 1], [], []>} : vector<16x32xf32>, vector<32x32xf32>, vector<16x32xf32> -> vector<16x32xf32>
      %c0_35 = arith.constant 0 : index
      %c0_36 = arith.constant 0 : index
      %37 = vector.load %arg9[%c0_35, %c0_36] : memref<16x32xf32, #tpu.memory_space<vmem>>, vector<16x32xf32>
      tpu.vector_store %arg9[%c0_35, %c0_36], %36 {strides = array<i32>} : memref<16x32xf32, #tpu.memory_space<vmem>>, vector<16x32xf32>,
    } else {
    }
    return
  }
  func.func @transform_0(%arg0: i32, %arg1: i32) -> (i32, i32) {
    %c0_i32 = arith.constant 0 : i32
    return %arg0, %arg1 : i32, i32
  }
  func.func @transform_1(%arg0: i32, %arg1: i32) -> (i32, i32) {
    %c0_i32 = arith.constant 0 : i32
    %c0_i32_0 = arith.constant 0 : i32
    return %arg1, %c0_i32 : i32, i32
  }
  func.func @transform_2(%arg0: i32, %arg1: i32) -> (i32, i32) {
    %c0_i32 = arith.constant 0 : i32
    %c0_i32_0 = arith.constant 0 : i32
    return %arg0, %c0_i32 : i32, i32
  }
  func.func @transform_3(%arg0: i32, %arg1: i32) -> (i32, i32) {
    %c0_i32 = arith.constant 0 : i32
    %c0_i32_0 = arith.constant 0 : i32
    return %arg0, %c0_i32 : i32, i32
  }
  func.func @transform_4(%arg0: i32, %arg1: i32) -> (i32, i32) {
    %c0_i32 = arith.constant 0 : i32
    %c0_i32_0 = arith.constant 0 : i32
    %c0_i32_1 = arith.constant 0 : i32
    return %c0_i32, %c0_i32_0 : i32, i32
  }
  func.func @transform_5(%arg0: i32, %arg1: i32) -> (i32, i32, i32) {
    %c0_i32 = arith.constant 0 : i32
    %c0_i32_0 = arith.constant 0 : i32
    %c0_i32_1 = arith.constant 0 : i32
    %c0_i32_2 = arith.constant 0 : i32
    return %c0_i32, %c0_i32_0, %c0_i32_1 : i32, i32, i32
  }
  func.func @transform_6(%arg0: i32, %arg1: i32) -> (i32, i32) {
    %c0_i32 = arith.constant 0 : i32
    %c0_i32_0 = arith.constant 0 : i32
    %c0_i32_1 = arith.constant 0 : i32
    return %c0_i32, %c0_i32_0 : i32, i32
  }
  func.func @transform_7(%arg0: i32, %arg1: i32) -> (i32, i32) {
    %c0_i32 = arith.constant 0 : i32
    %c0_i32_0 = arith.constant 0 : i32
    return %arg0, %c0_i32 : i32, i32
  }
}

module attributes {stable_mosaic.version = 11 : i64} {
  func.func @cheb_recur_kernel(%arg0: i32, %arg1: i32, %arg2: memref<16x16xbf16, #tpu.memory_space<vmem>>, %arg3: memref<16x32xbf16, #tpu.memory_space<vmem>>, %arg4: memref<16x32xf32, #tpu.memory_space<vmem>>, %arg5: memref<16x32xbf16, #tpu.memory_space<vmem>>, %arg6: memref<16x32xf32, #tpu.memory_space<vmem>>) attributes {dimension_semantics = [#tpu.dimension_semantics<parallel>, #tpu.dimension_semantics<arbitrary>], iteration_bounds = array<i64: 1, 1>, scalar_prefetch = 0 : i64, scratch_operands = 1 : i64, tpu.core_type = #tpu.core_type<tc>, window_params = [{transform_indices = @transform_0, window_bounds = array<i64: 16, 16>}, {transform_indices = @transform_1, window_bounds = array<i64: 16, 32>}, {transform_indices = @transform_2, window_bounds = array<i64: 16, 32>}, {transform_indices = @transform_3, window_bounds = array<i64: 16, 32>}]} {
    %c0_i32 = arith.constant 0 : i32
    %0 = arith.cmpi eq, %arg1, %c0_i32 : i32
    %1 = arith.extui %0 : i1 to i32
    %c0_i32_0 = arith.constant 0 : i32
    %2 = arith.cmpi ne, %1, %c0_i32_0 : i32
    scf.if %2 {
      %cst_10 = arith.constant 0.000000e+00 : f32
      %12 = vector.broadcast %cst_10 : f32 to vector<16x32xf32>
      %c0_11 = arith.constant 0 : index
      %c0_12 = arith.constant 0 : index
      %13 = vector.load %arg6[%c0_11, %c0_12] : memref<16x32xf32, #tpu.memory_space<vmem>>, vector<16x32xf32>
      tpu.vector_store %arg6[%c0_11, %c0_12], %12 {strides = array<i32>} : memref<16x32xf32, #tpu.memory_space<vmem>>, vector<16x32xf32>,
    } else {
    }
    %c0 = arith.constant 0 : index
    %c0_1 = arith.constant 0 : index
    %3 = vector.load %arg6[%c0, %c0_1] : memref<16x32xf32, #tpu.memory_space<vmem>>, vector<16x32xf32>
    %c0_2 = arith.constant 0 : index
    %c0_3 = arith.constant 0 : index
    %4 = vector.load %arg2[%c0_2, %c0_3] : memref<16x16xbf16, #tpu.memory_space<vmem>>, vector<16x16xbf16>
    %c0_4 = arith.constant 0 : index
    %c0_5 = arith.constant 0 : index
    %5 = vector.load %arg3[%c0_4, %c0_5] : memref<16x32xbf16, #tpu.memory_space<vmem>>, vector<16x32xbf16>
    %cst = arith.constant dense<0.000000e+00> : vector<16x32xf32>
    %6 = tpu.matmul %4, %5, %cst {dimension_numbers = #tpu.dot_dimension_numbers<[1], [0], [0], [1], [0, 0, 1, 1], [], []>} : vector<16x16xbf16>, vector<16x32xbf16>, vector<16x32xf32> -> vector<16x32xf32>
    %7 = arith.addf %3, %6 : vector<16x32xf32>
    %c0_6 = arith.constant 0 : index
    %c0_7 = arith.constant 0 : index
    %8 = vector.load %arg6[%c0_6, %c0_7] : memref<16x32xf32, #tpu.memory_space<vmem>>, vector<16x32xf32>
    tpu.vector_store %arg6[%c0_6, %c0_7], %7 {strides = array<i32>} : memref<16x32xf32, #tpu.memory_space<vmem>>, vector<16x32xf32>,
    %c0_i32_8 = arith.constant 0 : i32
    %9 = arith.cmpi eq, %arg1, %c0_i32_8 : i32
    %10 = arith.extui %9 : i1 to i32
    %c0_i32_9 = arith.constant 0 : i32
    %11 = arith.cmpi ne, %10, %c0_i32_9 : i32
    scf.if %11 {
      %c0_10 = arith.constant 0 : index
      %c0_11 = arith.constant 0 : index
      %12 = vector.load %arg6[%c0_10, %c0_11] : memref<16x32xf32, #tpu.memory_space<vmem>>, vector<16x32xf32>
      %c0_12 = arith.constant 0 : index
      %c0_13 = arith.constant 0 : index
      %13 = vector.load %arg4[%c0_12, %c0_13] : memref<16x32xf32, #tpu.memory_space<vmem>>, vector<16x32xf32>
      tpu.vector_store %arg4[%c0_12, %c0_13], %12 {strides = array<i32>} : memref<16x32xf32, #tpu.memory_space<vmem>>, vector<16x32xf32>,
      %14 = arith.truncf %12 : vector<16x32xf32> to vector<16x32xbf16>
      %c0_14 = arith.constant 0 : index
      %c0_15 = arith.constant 0 : index
      %15 = vector.load %arg5[%c0_14, %c0_15] : memref<16x32xbf16, #tpu.memory_space<vmem>>, vector<16x32xbf16>
      tpu.vector_store %arg5[%c0_14, %c0_15], %14 {strides = array<i32>} : memref<16x32xbf16, #tpu.memory_space<vmem>>, vector<16x32xbf16>,
    } else {
    }
    return
  }
  func.func @transform_0(%arg0: i32, %arg1: i32) -> (i32, i32) {
    %c0_i32 = arith.constant 0 : i32
    return %arg0, %arg1 : i32, i32
  }
  func.func @transform_1(%arg0: i32, %arg1: i32) -> (i32, i32) {
    %c0_i32 = arith.constant 0 : i32
    %c0_i32_0 = arith.constant 0 : i32
    return %arg1, %c0_i32 : i32, i32
  }
  func.func @transform_2(%arg0: i32, %arg1: i32) -> (i32, i32) {
    %c0_i32 = arith.constant 0 : i32
    %c0_i32_0 = arith.constant 0 : i32
    return %arg0, %c0_i32 : i32, i32
  }
  func.func @transform_3(%arg0: i32, %arg1: i32) -> (i32, i32) {
    %c0_i32 = arith.constant 0 : i32
    %c0_i32_0 = arith.constant 0 : i32
    return %arg0, %c0_i32 : i32, i32
  }
}

module attributes {stable_mosaic.version = 11 : i64} {
  func.func @cheb_final_kernel(%arg0: i32, %arg1: i32, %arg2: memref<16x16xbf16, #tpu.memory_space<vmem>>, %arg3: memref<16x32xbf16, #tpu.memory_space<vmem>>, %arg4: memref<16x32xf32, #tpu.memory_space<vmem>>, %arg5: memref<16x32xf32, #tpu.memory_space<vmem>>, %arg6: memref<3x32x32xf32, #tpu.memory_space<vmem>>, %arg7: memref<1x32xf32, #tpu.memory_space<vmem>>, %arg8: memref<16x32xf32, #tpu.memory_space<vmem>>, %arg9: memref<16x32xf32, #tpu.memory_space<vmem>>) attributes {dimension_semantics = [#tpu.dimension_semantics<parallel>, #tpu.dimension_semantics<arbitrary>], iteration_bounds = array<i64: 1, 1>, scalar_prefetch = 0 : i64, scratch_operands = 1 : i64, tpu.core_type = #tpu.core_type<tc>, window_params = [{transform_indices = @transform_0, window_bounds = array<i64: 16, 16>}, {transform_indices = @transform_1, window_bounds = array<i64: 16, 32>}, {transform_indices = @transform_2, window_bounds = array<i64: 16, 32>}, {transform_indices = @transform_3, window_bounds = array<i64: 16, 32>}, {pipeline_mode = #tpu.pipeline_mode<synchronous>, transform_indices = @transform_4, window_bounds = array<i64: 3, 32, 32>}, {pipeline_mode = #tpu.pipeline_mode<synchronous>, transform_indices = @transform_5, window_bounds = array<i64: 1, 32>}, {transform_indices = @transform_6, window_bounds = array<i64: 16, 32>}]} {
    %c0_i32 = arith.constant 0 : i32
    %0 = arith.cmpi eq, %arg1, %c0_i32 : i32
    %1 = arith.extui %0 : i1 to i32
    %c0_i32_0 = arith.constant 0 : i32
    %2 = arith.cmpi ne, %1, %c0_i32_0 : i32
    scf.if %2 {
      %cst_10 = arith.constant 0.000000e+00 : f32
      %12 = vector.broadcast %cst_10 : f32 to vector<16x32xf32>
      %c0_11 = arith.constant 0 : index
      %c0_12 = arith.constant 0 : index
      %13 = vector.load %arg9[%c0_11, %c0_12] : memref<16x32xf32, #tpu.memory_space<vmem>>, vector<16x32xf32>
      tpu.vector_store %arg9[%c0_11, %c0_12], %12 {strides = array<i32>} : memref<16x32xf32, #tpu.memory_space<vmem>>, vector<16x32xf32>,
    } else {
    }
    %c0 = arith.constant 0 : index
    %c0_1 = arith.constant 0 : index
    %3 = vector.load %arg9[%c0, %c0_1] : memref<16x32xf32, #tpu.memory_space<vmem>>, vector<16x32xf32>
    %c0_2 = arith.constant 0 : index
    %c0_3 = arith.constant 0 : index
    %4 = vector.load %arg2[%c0_2, %c0_3] : memref<16x16xbf16, #tpu.memory_space<vmem>>, vector<16x16xbf16>
    %c0_4 = arith.constant 0 : index
    %c0_5 = arith.constant 0 : index
    %5 = vector.load %arg3[%c0_4, %c0_5] : memref<16x32xbf16, #tpu.memory_space<vmem>>, vector<16x32xbf16>
    %cst = arith.constant dense<0.000000e+00> : vector<16x32xf32>
    %6 = tpu.matmul %4, %5, %cst {dimension_numbers = #tpu.dot_dimension_numbers<[1], [0], [0], [1], [0, 0, 1, 1], [], []>} : vector<16x16xbf16>, vector<16x32xbf16>, vector<16x32xf32> -> vector<16x32xf32>
    %7 = arith.addf %3, %6 : vector<16x32xf32>
    %c0_6 = arith.constant 0 : index
    %c0_7 = arith.constant 0 : index
    %8 = vector.load %arg9[%c0_6, %c0_7] : memref<16x32xf32, #tpu.memory_space<vmem>>, vector<16x32xf32>
    tpu.vector_store %arg9[%c0_6, %c0_7], %7 {strides = array<i32>} : memref<16x32xf32, #tpu.memory_space<vmem>>, vector<16x32xf32>,
    %c0_i32_8 = arith.constant 0 : i32
    %9 = arith.cmpi eq, %arg1, %c0_i32_8 : i32
    %10 = arith.extui %9 : i1 to i32
    %c0_i32_9 = arith.constant 0 : i32
    %11 = arith.cmpi ne, %10, %c0_i32_9 : i32
    scf.if %11 {
      %c0_10 = arith.constant 0 : index
      %c0_11 = arith.constant 0 : index
      %12 = vector.load %arg9[%c0_10, %c0_11] : memref<16x32xf32, #tpu.memory_space<vmem>>, vector<16x32xf32>
      %cst_12 = arith.constant 2.000000e+00 : f32
      %13 = vector.broadcast %cst_12 : f32 to vector<16x32xf32>
      %14 = arith.mulf %13, %12 : vector<16x32xf32>
      %c0_13 = arith.constant 0 : index
      %c0_14 = arith.constant 0 : index
      %15 = vector.load %arg4[%c0_13, %c0_14] : memref<16x32xf32, #tpu.memory_space<vmem>>, vector<16x32xf32>
      %16 = arith.subf %14, %15 : vector<16x32xf32>
      %c2 = arith.constant 2 : index
      %c0_15 = arith.constant 0 : index
      %c0_16 = arith.constant 0 : index
      %17 = vector.load %arg6[%c2, %c0_15, %c0_16] : memref<3x32x32xf32, #tpu.memory_space<vmem>>, vector<1x32x32xf32>
      %18 = vector.shape_cast %17 : vector<1x32x32xf32> to vector<32x32xf32>
      %cst_17 = arith.constant dense<0.000000e+00> : vector<16x32xf32>
      %19 = tpu.matmul %16, %18, %cst_17 {dimension_numbers = #tpu.dot_dimension_numbers<[1], [0], [0], [1], [0, 0, 1, 1], [], []>} : vector<16x32xf32>, vector<32x32xf32>, vector<16x32xf32> -> vector<16x32xf32>
      %c0_18 = arith.constant 0 : index
      %c0_19 = arith.constant 0 : index
      %20 = vector.load %arg4[%c0_18, %c0_19] : memref<16x32xf32, #tpu.memory_space<vmem>>, vector<16x32xf32>
      %c0_20 = arith.constant 0 : index
      %c0_21 = arith.constant 0 : index
      %c0_22 = arith.constant 0 : index
      %21 = vector.load %arg6[%c0_20, %c0_21, %c0_22] : memref<3x32x32xf32, #tpu.memory_space<vmem>>, vector<1x32x32xf32>
      %22 = vector.shape_cast %21 : vector<1x32x32xf32> to vector<32x32xf32>
      %cst_23 = arith.constant dense<0.000000e+00> : vector<16x32xf32>
      %23 = tpu.matmul %20, %22, %cst_23 {dimension_numbers = #tpu.dot_dimension_numbers<[1], [0], [0], [1], [0, 0, 1, 1], [], []>} : vector<16x32xf32>, vector<32x32xf32>, vector<16x32xf32> -> vector<16x32xf32>
      %24 = arith.addf %19, %23 : vector<16x32xf32>
      %c0_24 = arith.constant 0 : index
      %c0_25 = arith.constant 0 : index
      %25 = vector.load %arg5[%c0_24, %c0_25] : memref<16x32xf32, #tpu.memory_space<vmem>>, vector<16x32xf32>
      %c1 = arith.constant 1 : index
      %c0_26 = arith.constant 0 : index
      %c0_27 = arith.constant 0 : index
      %26 = vector.load %arg6[%c1, %c0_26, %c0_27] : memref<3x32x32xf32, #tpu.memory_space<vmem>>, vector<1x32x32xf32>
      %27 = vector.shape_cast %26 : vector<1x32x32xf32> to vector<32x32xf32>
      %cst_28 = arith.constant dense<0.000000e+00> : vector<16x32xf32>
      %28 = tpu.matmul %25, %27, %cst_28 {dimension_numbers = #tpu.dot_dimension_numbers<[1], [0], [0], [1], [0, 0, 1, 1], [], []>} : vector<16x32xf32>, vector<32x32xf32>, vector<16x32xf32> -> vector<16x32xf32>
      %29 = arith.addf %24, %28 : vector<16x32xf32>
      %c0_29 = arith.constant 0 : index
      %c0_30 = arith.constant 0 : index
      %30 = vector.load %arg7[%c0_29, %c0_30] : memref<1x32xf32, #tpu.memory_space<vmem>>, vector<1x32xf32>
      %31 = vector.broadcast %30 : vector<1x32xf32> to vector<16x32xf32>
      %32 = arith.addf %29, %31 : vector<16x32xf32>
      %cst_31 = arith.constant 0.000000e+00 : f32
      %33 = vector.broadcast %cst_31 : f32 to vector<16x32xf32>
      %34 = arith.maximumf %32, %33 : vector<16x32xf32>
      %c0_32 = arith.constant 0 : index
      %c0_33 = arith.constant 0 : index
      %35 = vector.load %arg8[%c0_32, %c0_33] : memref<16x32xf32, #tpu.memory_space<vmem>>, vector<16x32xf32>
      tpu.vector_store %arg8[%c0_32, %c0_33], %34 {strides = array<i32>} : memref<16x32xf32, #tpu.memory_space<vmem>>, vector<16x32xf32>,
    } else {
    }
    return
  }
  func.func @transform_0(%arg0: i32, %arg1: i32) -> (i32, i32) {
    %c0_i32 = arith.constant 0 : i32
    return %arg0, %arg1 : i32, i32
  }
  func.func @transform_1(%arg0: i32, %arg1: i32) -> (i32, i32) {
    %c0_i32 = arith.constant 0 : i32
    %c0_i32_0 = arith.constant 0 : i32
    return %arg1, %c0_i32 : i32, i32
  }
  func.func @transform_2(%arg0: i32, %arg1: i32) -> (i32, i32) {
    %c0_i32 = arith.constant 0 : i32
    %c0_i32_0 = arith.constant 0 : i32
    return %arg0, %c0_i32 : i32, i32
  }
  func.func @transform_3(%arg0: i32, %arg1: i32) -> (i32, i32) {
    %c0_i32 = arith.constant 0 : i32
    %c0_i32_0 = arith.constant 0 : i32
    return %arg0, %c0_i32 : i32, i32
  }
  func.func @transform_4(%arg0: i32, %arg1: i32) -> (i32, i32, i32) {
    %c0_i32 = arith.constant 0 : i32
    %c0_i32_0 = arith.constant 0 : i32
    %c0_i32_1 = arith.constant 0 : i32
    %c0_i32_2 = arith.constant 0 : i32
    return %c0_i32, %c0_i32_0, %c0_i32_1 : i32, i32, i32
  }
  func.func @transform_5(%arg0: i32, %arg1: i32) -> (i32, i32) {
    %c0_i32 = arith.constant 0 : i32
    %c0_i32_0 = arith.constant 0 : i32
    %c0_i32_1 = arith.constant 0 : i32
    return %c0_i32, %c0_i32_0 : i32, i32
  }
  func.func @transform_6(%arg0: i32, %arg1: i32) -> (i32, i32) {
    %c0_i32 = arith.constant 0 : i32
    %c0_i32_0 = arith.constant 0 : i32
    return %arg0, %c0_i32 : i32, i32
  }
}

module attributes {stable_mosaic.version = 11 : i64} {
  func.func @pool_fc_logsoftmax_kernel(%arg0: i32, %arg1: memref<2x16xf32, #tpu.memory_space<vmem>>, %arg2: memref<16x32xf32, #tpu.memory_space<vmem>>, %arg3: memref<32x8xf32, #tpu.memory_space<vmem>>, %arg4: memref<1x8xf32, #tpu.memory_space<vmem>>, %arg5: memref<2x8xf32, #tpu.memory_space<vmem>>, %arg6: memref<2x32xf32, #tpu.memory_space<vmem>>) attributes {dimension_semantics = [#tpu.dimension_semantics<arbitrary>], iteration_bounds = array<i64: 1>, scalar_prefetch = 0 : i64, scratch_operands = 1 : i64, tpu.core_type = #tpu.core_type<tc>, window_params = [{transform_indices = @transform_0, window_bounds = array<i64: 2, 16>}, {transform_indices = @transform_1, window_bounds = array<i64: 16, 32>}, {pipeline_mode = #tpu.pipeline_mode<synchronous>, transform_indices = @transform_2, window_bounds = array<i64: 32, 8>}, {pipeline_mode = #tpu.pipeline_mode<synchronous>, transform_indices = @transform_3, window_bounds = array<i64: 1, 8>}, {pipeline_mode = #tpu.pipeline_mode<synchronous>, transform_indices = @transform_4, window_bounds = array<i64: 2, 8>}]} {
    %c0_i32 = arith.constant 0 : i32
    %0 = arith.cmpi eq, %arg0, %c0_i32 : i32
    %1 = arith.extui %0 : i1 to i32
    %c0_i32_0 = arith.constant 0 : i32
    %2 = arith.cmpi ne, %1, %c0_i32_0 : i32
    scf.if %2 {
      %cst_10 = arith.constant 0.000000e+00 : f32
      %12 = vector.broadcast %cst_10 : f32 to vector<2x32xf32>
      %c0_11 = arith.constant 0 : index
      %c0_12 = arith.constant 0 : index
      %13 = vector.load %arg6[%c0_11, %c0_12] : memref<2x32xf32, #tpu.memory_space<vmem>>, vector<2x32xf32>
      tpu.vector_store %arg6[%c0_11, %c0_12], %12 {strides = array<i32>} : memref<2x32xf32, #tpu.memory_space<vmem>>, vector<2x32xf32>,
    } else {
    }
    %c0 = arith.constant 0 : index
    %c0_1 = arith.constant 0 : index
    %3 = vector.load %arg6[%c0, %c0_1] : memref<2x32xf32, #tpu.memory_space<vmem>>, vector<2x32xf32>
    %c0_2 = arith.constant 0 : index
    %c0_3 = arith.constant 0 : index
    %4 = vector.load %arg1[%c0_2, %c0_3] : memref<2x16xf32, #tpu.memory_space<vmem>>, vector<2x16xf32>
    %c0_4 = arith.constant 0 : index
    %c0_5 = arith.constant 0 : index
    %5 = vector.load %arg2[%c0_4, %c0_5] : memref<16x32xf32, #tpu.memory_space<vmem>>, vector<16x32xf32>
    %cst = arith.constant dense<0.000000e+00> : vector<2x32xf32>
    %6 = tpu.matmul %4, %5, %cst {dimension_numbers = #tpu.dot_dimension_numbers<[1], [0], [0], [1], [0, 0, 1, 1], [], []>} : vector<2x16xf32>, vector<16x32xf32>, vector<2x32xf32> -> vector<2x32xf32>
    %7 = arith.addf %3, %6 : vector<2x32xf32>
    %c0_6 = arith.constant 0 : index
    %c0_7 = arith.constant 0 : index
    %8 = vector.load %arg6[%c0_6, %c0_7] : memref<2x32xf32, #tpu.memory_space<vmem>>, vector<2x32xf32>
    tpu.vector_store %arg6[%c0_6, %c0_7], %7 {strides = array<i32>} : memref<2x32xf32, #tpu.memory_space<vmem>>, vector<2x32xf32>,
    %c0_i32_8 = arith.constant 0 : i32
    %9 = arith.cmpi eq, %arg0, %c0_i32_8 : i32
    %10 = arith.extui %9 : i1 to i32
    %c0_i32_9 = arith.constant 0 : i32
    %11 = arith.cmpi ne, %10, %c0_i32_9 : i32
    scf.if %11 {
      %c0_10 = arith.constant 0 : index
      %c0_11 = arith.constant 0 : index
      %12 = vector.load %arg6[%c0_10, %c0_11] : memref<2x32xf32, #tpu.memory_space<vmem>>, vector<2x32xf32>
      %c0_12 = arith.constant 0 : index
      %c0_13 = arith.constant 0 : index
      %13 = vector.load %arg3[%c0_12, %c0_13] : memref<32x8xf32, #tpu.memory_space<vmem>>, vector<32x8xf32>
      %cst_14 = arith.constant dense<0.000000e+00> : vector<2x8xf32>
      %14 = tpu.matmul %12, %13, %cst_14 {dimension_numbers = #tpu.dot_dimension_numbers<[1], [0], [0], [1], [0, 0, 1, 1], [], []>} : vector<2x32xf32>, vector<32x8xf32>, vector<2x8xf32> -> vector<2x8xf32>
      %c0_15 = arith.constant 0 : index
      %c0_16 = arith.constant 0 : index
      %15 = vector.load %arg4[%c0_15, %c0_16] : memref<1x8xf32, #tpu.memory_space<vmem>>, vector<1x8xf32>
      %16 = vector.broadcast %15 : vector<1x8xf32> to vector<2x8xf32>
      %17 = arith.addf %14, %16 : vector<2x8xf32>
      %cst_17 = arith.constant dense<0xFF800000> : vector<2xf32>
      %18 = vector.multi_reduction <maximumf>, %17, %cst_17 [1] : vector<2x8xf32> to vector<2xf32>
      %19 = vector.shape_cast %18 : vector<2xf32> to vector<2x1xf32>
      %20 = vector.broadcast %19 : vector<2x1xf32> to vector<2x8xf32>
      %21 = arith.subf %17, %20 : vector<2x8xf32>
      %22 = math.exp %21 : vector<2x8xf32>
      %cst_18 = arith.constant dense<0.000000e+00> : vector<2xf32>
      %23 = vector.multi_reduction <add>, %22, %cst_18 [1] : vector<2x8xf32> to vector<2xf32>
      %24 = vector.shape_cast %23 : vector<2xf32> to vector<2x1xf32>
      %25 = math.log %24 : vector<2x1xf32>
      %26 = vector.broadcast %25 : vector<2x1xf32> to vector<2x8xf32>
      %27 = arith.subf %21, %26 : vector<2x8xf32>
      %c0_19 = arith.constant 0 : index
      %c0_20 = arith.constant 0 : index
      %28 = vector.load %arg5[%c0_19, %c0_20] : memref<2x8xf32, #tpu.memory_space<vmem>>, vector<2x8xf32>
      tpu.vector_store %arg5[%c0_19, %c0_20], %27 {strides = array<i32>} : memref<2x8xf32, #tpu.memory_space<vmem>>, vector<2x8xf32>,
    } else {
    }
    return
  }
  func.func @transform_0(%arg0: i32) -> (i32, i32) {
    %c0_i32 = arith.constant 0 : i32
    %c0_i32_0 = arith.constant 0 : i32
    return %c0_i32, %arg0 : i32, i32
  }
  func.func @transform_1(%arg0: i32) -> (i32, i32) {
    %c0_i32 = arith.constant 0 : i32
    %c0_i32_0 = arith.constant 0 : i32
    return %arg0, %c0_i32 : i32, i32
  }
  func.func @transform_2(%arg0: i32) -> (i32, i32) {
    %c0_i32 = arith.constant 0 : i32
    %c0_i32_0 = arith.constant 0 : i32
    %c0_i32_1 = arith.constant 0 : i32
    return %c0_i32, %c0_i32_0 : i32, i32
  }
  func.func @transform_3(%arg0: i32) -> (i32, i32) {
    %c0_i32 = arith.constant 0 : i32
    %c0_i32_0 = arith.constant 0 : i32
    %c0_i32_1 = arith.constant 0 : i32
    return %c0_i32, %c0_i32_0 : i32, i32
  }
  func.func @transform_4(%arg0: i32) -> (i32, i32) {
    %c0_i32 = arith.constant 0 : i32
    %c0_i32_0 = arith.constant 0 : i32
    %c0_i32_1 = arith.constant 0 : i32
    return %c0_i32, %c0_i32_0 : i32, i32
  }
}

</mosaic_0001>

<llo_original>
// kernel: graph_chebnet_forward.5
$region0: #{graph_chebnet_forward.5}
  #allocation0 [shape = 'u32[]', space=smem, size = 0x4, offset = 0x4, fixed_abs, tag = 'smem constant byte address 0x4 - core index']
  #allocation1 [shape = 'u32[72,128]{1,0:T(1,128)}', space=vmem, size = 0x9000, scoped, tag = 'internal scratch']
  #allocation2 [shape = 'f32[32,16]{1,0:T(8,128)}', space=vmem, size = 0x4000, scoped, tag = 'scratch operand']
  %s0 = inlined_call_operand.vmem [shape: bf16[32,32], index: 0, kind: input, shape index: {}]
  %s1 = inlined_call_operand.vmem [shape: bf16[32,16], index: 1, kind: input, shape index: {}]
  %s2 = inlined_call_operand.vmem [shape: f32[32,16], index: 2, kind: output, shape index: {0}]
  %s3 = inlined_call_operand.vmem [shape: bf16[32,16], index: 3, kind: output, shape index: {1}]
  %4 = xla_tuple %s2, %s3
  %s5 = sld [smem:[#allocation0]]
  $region34: #{graph_chebnet_forward.5} parent=0
    _
  %s7 = ssub.s32 1, %s5
  %s8 = scalar_select 0, %s7, %s5
  // Predicated region
  $region2: #{graph_chebnet_forward.5} parent=0 // pred_check
    _
  $region3: #{graph_chebnet_forward.5} parent=0 // pred_check_branch
    %10 = sbr.rel (0) target = $region5
  $region4: #{graph_chebnet_forward.5} parent=0 // pred_region
    _
  $region5: #{graph_chebnet_forward.5} parent=0 // pred_fallthru
    _
  // Predicated region
  $region6: #{graph_chebnet_forward.5} parent=0 // pred_check
    _
  $region7: #{graph_chebnet_forward.5} parent=0 // pred_check_branch
    %12 = sbr.rel (0) target = $region9
  $region8: #{graph_chebnet_forward.5} parent=0 // pred_region
    _
  $region9: #{graph_chebnet_forward.5} parent=0 // pred_fallthru
    _
  %p14 = scmp.eq.s32.totalorder 0, 0
  // Predicated region
  $region10: #{graph_chebnet_forward.5} parent=0 // pred_check
    %p15 = pneg %p14
  $region11: #{graph_chebnet_forward.5} parent=0 // pred_check_branch
    %17 = sbr.rel (%p15) target = $region13
  $region12: #{graph_chebnet_forward.5} parent=0 // pred_region
    %vm18 = vcmask 130048
    %19 = vst.msk [vmem:[#allocation2] sm:$0xff] %vm18, 0.0
    %20 = vst.msk [vmem:[#allocation2 + $0x8] sm:$0xff] %vm18, 0.0
    %21 = vst.msk [vmem:[#allocation2 + $0x10] sm:$0xff] %vm18, 0.0
    %22 = vst.msk [vmem:[#allocation2 + $0x18] sm:$0xff] %vm18, 0.0
  $region13: #{graph_chebnet_forward.5} parent=0 // pred_fallthru
    _
  %v23 = vld [vmem:[#allocation2] sm:$0xff]
  %v24 = vld [vmem:[#allocation2 + $0x8] sm:$0xff]
  %v25 = vld [vmem:[#allocation2 + $0x10] sm:$0xff]
  %v26 = vld [vmem:[#allocation2 + $0x18] sm:$0xff]
  %v27 = vld [vmem:[%s0] sm:$0xf]
  %v28 = vld [vmem:[%s0 + $0x4] sm:$0xf]
  %v29 = vld [vmem:[%s0 + $0x8] sm:$0xf]
  %v30 = vld [vmem:[%s0 + $0xc] sm:$0xf]
  %v31 = vld [vmem:[%s1] sm:$0xf]
  %v32 = vld [vmem:[%s1 + $0x4] sm:$0xf]
  %v33 = vld [vmem:[%s1 + $0x8] sm:$0xf]
  %v34 = vld [vmem:[%s1 + $0xc] sm:$0xf]
  %v39 = vunpack.c.l.b16 %v27
  %v40 = vunpack.c.l.b16 %v28
  %v41 = vunpack.c.l.b16 %v29
  %v42 = vunpack.c.l.b16 %v30
  %v43 = vpack.c.b16 %v40, %v39
  %v44 = vpack.c.b16 %v42, %v41
  %v49 = vunpack.c.l.b16 %v31
  %v50 = vunpack.c.l.b16 %v32
  %v51 = vunpack.c.l.b16 %v33
  %v52 = vunpack.c.l.b16 %v34
  %v53 = vpack.c.b16 %v50, %v49
  %v54 = vpack.c.b16 %v52, %v51
  %vm57 = vcmask 261120
  %v59 = vsel %vm57, %v43, 0
  %v62 = vsel %vm57, %v44, 0
  %64 = vmatpush.bf16.msra.mxu0 0
  %65 = vmatpush.bf16.msra.mxu0 0
  %66 = vmatpush.bf16.msra.mxu0 0
  %67 = vmatpush.bf16.msra.mxu0 0
  %68 = vmatpush.bf16.msra.mxu0 0
  %69 = vmatpush.bf16.msra.mxu0 0
  %70 = vmatpush.bf16.msra.mxu0 %v54
  %71 = vmatpush.bf16.msra.mxu0 %v53
  %72 = vmatmul.bf16.gmra.mxu0 %v59
  %v73 = vpop.f32.mrf.mxu0
  %v74 = vadd.f32 0.0, %v73
  %v75 = vpop.f32.mrf.mxu0
  %v76 = vadd.f32 0.0, %v75
  %77 = vmatmul.bf16.gmra.mxu0 %v62
  %v78 = vpop.f32.mrf.mxu0
  %v79 = vadd.f32 0.0, %v78
  %v80 = vpop.f32.mrf.mxu0
  %v81 = vadd.f32 0.0, %v80
  %82 = vdwg.mxu0
  %v83 = vadd.f32 %v23, %v74
  %v84 = vadd.f32 %v24, %v76
  %v85 = vadd.f32 %v25, %v79
  %v86 = vadd.f32 %v26, %v81
  %vm87 = vcmask 130048
  %88 = vst.msk [vmem:[#allocation2] sm:$0xff] %vm87, %v83
  %89 = vst.msk [vmem:[#allocation2 + $0x8] sm:$0xff] %vm87, %v84
  %90 = vst.msk [vmem:[#allocation2 + $0x10] sm:$0xff] %vm87, %v85
  %91 = vst.msk [vmem:[#allocation2 + $0x18] sm:$0xff] %vm87, %v86
  // Predicated region
  $region14: #{graph_chebnet_forward.5} parent=0 // pred_check
    %p92 = pneg %p14
  $region15: #{graph_chebnet_forward.5} parent=0 // pred_check_branch
    %94 = sbr.rel (%p92) target = $region17
  $region16: #{graph_chebnet_forward.5} parent=0 // pred_region
    %v95 = vld [vmem:[#allocation2] sm:$0xff]
    %v96 = vld [vmem:[#allocation2 + $0x8] sm:$0xff]
    %v97 = vld [vmem:[#allocation2 + $0x10] sm:$0xff]
    %v98 = vld [vmem:[#allocation2 + $0x18] sm:$0xff]
    %99 = vst.msk [vmem:[%s2] sm:$0xff] %vm87, %v95
    %100 = vst.msk [vmem:[%s2 + $0x8] sm:$0xff] %vm87, %v96
    %101 = vst.msk [vmem:[%s2 + $0x10] sm:$0xff] %vm87, %v97
    %102 = vst.msk [vmem:[%s2 + $0x18] sm:$0xff] %vm87, %v98
    %v103 = vpack.c.bf16 %v95, %v95
    %v104 = vpack.c.bf16 %v96, %v96
    %v105 = vpack.c.bf16 %v97, %v97
    %v106 = vpack.c.bf16 %v98, %v98
    %vm107 = vcmask 125952
    %108 = vst.msk [vmem:[%s3] sm:$0xf] %vm107, %v103
    %109 = vst.msk [vmem:[%s3 + $0x4] sm:$0xf] %vm107, %v104
    %110 = vst.msk [vmem:[%s3 + $0x8] sm:$0xf] %vm107, %v105
    %111 = vst.msk [vmem:[%s3 + $0xc] sm:$0xf] %vm107, %v106
  $region17: #{graph_chebnet_forward.5} parent=0 // pred_fallthru
    _
  // Predicated region
  $region18: #{graph_chebnet_forward.5} parent=0 // pred_check
    _
  $region19: #{graph_chebnet_forward.5} parent=0 // pred_check_branch
    %113 = sbr.rel (0) target = $region21
  $region20: #{graph_chebnet_forward.5} parent=0 // pred_region
    _
  $region21: #{graph_chebnet_forward.5} parent=0 // pred_fallthru
    _
  // Predicated region
  $region22: #{graph_chebnet_forward.5} parent=0 // pred_check
    _
  $region23: #{graph_chebnet_forward.5} parent=0 // pred_check_branch
    %115 = sbr.rel (0) target = $region25
  $region24: #{graph_chebnet_forward.5} parent=0 // pred_region
    _
  $region25: #{graph_chebnet_forward.5} parent=0 // pred_fallthru
    _
  // Predicated region
  $region26: #{graph_chebnet_forward.5} parent=0 // pred_check
    _
  $region27: #{graph_chebnet_forward.5} parent=0 // pred_check_branch
    %117 = sbr.rel (0) target = $region29
  $region28: #{graph_chebnet_forward.5} parent=0 // pred_region
    _
  $region29: #{graph_chebnet_forward.5} parent=0 // pred_fallthru
    _
  // Predicated region
  $region30: #{graph_chebnet_forward.5} parent=0 // pred_check
    _
  $region31: #{graph_chebnet_forward.5} parent=0 // pred_check_branch
    %119 = sbr.rel (0) target = $region33
  $region32: #{graph_chebnet_forward.5} parent=0 // pred_region
    _
  $region33: #{graph_chebnet_forward.5} parent=0 // pred_fallthru
    _

// kernel: graph_chebnet_forward.7
$region0: #{graph_chebnet_forward.7}
  #allocation0 [shape = 'u32[]', space=smem, size = 0x4, offset = 0x4, fixed_abs, tag = 'smem constant byte address 0x4 - core index']
  #allocation1 [shape = 'u32[72,128]{1,0:T(1,128)}', space=vmem, size = 0x9000, scoped, tag = 'internal scratch']
  #allocation2 [shape = 'f32[16,32]{1,0:T(8,128)}', space=vmem, size = 0x2000, scoped, tag = 'scratch operand']
  %s0 = inlined_call_operand.vmem [shape: bf16[16,16], index: 0, kind: input, shape index: {}]
  %s1 = inlined_call_operand.vmem [shape: bf16[16,32], index: 1, kind: input, shape index: {}]
  %s2 = inlined_call_operand.vmem [shape: f32[16,32], index: 2, kind: output, shape index: {0}]
  %s3 = inlined_call_operand.vmem [shape: bf16[16,32], index: 3, kind: output, shape index: {1}]
  %4 = xla_tuple %s2, %s3
  %s5 = sld [smem:[#allocation0]]
  $region34: #{graph_chebnet_forward.7} parent=0
    _
  %s7 = ssub.s32 1, %s5
  %s8 = scalar_select 0, %s7, %s5
  // Predicated region
  $region2: #{graph_chebnet_forward.7} parent=0 // pred_check
    _
  $region3: #{graph_chebnet_forward.7} parent=0 // pred_check_branch
    %10 = sbr.rel (0) target = $region5
  $region4: #{graph_chebnet_forward.7} parent=0 // pred_region
    _
  $region5: #{graph_chebnet_forward.7} parent=0 // pred_fallthru
    _
  // Predicated region
  $region6: #{graph_chebnet_forward.7} parent=0 // pred_check
    _
  $region7: #{graph_chebnet_forward.7} parent=0 // pred_check_branch
    %12 = sbr.rel (0) target = $region9
  $region8: #{graph_chebnet_forward.7} parent=0 // pred_region
    _
  $region9: #{graph_chebnet_forward.7} parent=0 // pred_fallthru
    _
  %p14 = scmp.eq.s32.totalorder 0, 0
  // Predicated region
  $region10: #{graph_chebnet_forward.7} parent=0 // pred_check
    %p15 = pneg %p14
  $region11: #{graph_chebnet_forward.7} parent=0 // pred_check_branch
    %17 = sbr.rel (%p15) target = $region13
  $region12: #{graph_chebnet_forward.7} parent=0 // pred_region
    %vm18 = vcmask 261120
    %19 = vst.msk [vmem:[#allocation2] sm:$0xff] %vm18, 0.0
    %20 = vst.msk [vmem:[#allocation2 + $0x8] sm:$0xff] %vm18, 0.0
  $region13: #{graph_chebnet_forward.7} parent=0 // pred_fallthru
    _
  %v21 = vld [vmem:[#allocation2] sm:$0xff]
  %v22 = vld [vmem:[#allocation2 + $0x8] sm:$0xff]
  %v23 = vld [vmem:[%s0] sm:$0xf]
  %v24 = vld [vmem:[%s0 + $0x4] sm:$0xf]
  %v25 = vld [vmem:[%s1] sm:$0xf]
  %v26 = vld [vmem:[%s1 + $0x4] sm:$0xf]
  %v29 = vunpack.c.l.b16 %v23
  %v30 = vunpack.c.l.b16 %v24
  %v31 = vpack.c.b16 %v30, %v29
  %v34 = vunpack.c.l.b16 %v25
  %v35 = vunpack.c.l.b16 %v26
  %v36 = vpack.c.b16 %v35, %v34
  %vm38 = vcmask 130048
  %v40 = vsel %vm38, %v31, 0
  %42 = vmatpush.bf16.msra.mxu0 0
  %43 = vmatpush.bf16.msra.mxu0 0
  %44 = vmatpush.bf16.msra.mxu0 0
  %45 = vmatpush.bf16.msra.mxu0 0
  %46 = vmatpush.bf16.msra.mxu0 0
  %47 = vmatpush.bf16.msra.mxu0 0
  %48 = vmatpush.bf16.msra.mxu0 0
  %49 = vmatpush.bf16.msra.mxu0 %v36
  %50 = vmatmul.bf16.gmra.mxu0 %v40
  %v51 = vpop.f32.mrf.mxu0
  %v52 = vadd.f32 0.0, %v51
  %v53 = vpop.f32.mrf.mxu0
  %v54 = vadd.f32 0.0, %v53
  %55 = vdwg.mxu0
  %v56 = vadd.f32 %v21, %v52
  %v57 = vadd.f32 %v22, %v54
  %vm58 = vcmask 261120
  %59 = vst.msk [vmem:[#allocation2] sm:$0xff] %vm58, %v56
  %60 = vst.msk [vmem:[#allocation2 + $0x8] sm:$0xff] %vm58, %v57
  // Predicated region
  $region14: #{graph_chebnet_forward.7} parent=0 // pred_check
    %p61 = pneg %p14
  $region15: #{graph_chebnet_forward.7} parent=0 // pred_check_branch
    %63 = sbr.rel (%p61) target = $region17
  $region16: #{graph_chebnet_forward.7} parent=0 // pred_region
    %v64 = vld [vmem:[#allocation2] sm:$0xff]
    %v65 = vld [vmem:[#allocation2 + $0x8] sm:$0xff]
    %66 = vst.msk [vmem:[%s2] sm:$0xff] %vm58, %v64
    %67 = vst.msk [vmem:[%s2 + $0x8] sm:$0xff] %vm58, %v65
    %v68 = vpack.c.bf16 %v64, %v64
    %v69 = vpack.c.bf16 %v65, %v65
    %vm70 = vcmask 257024
    %71 = vst.msk [vmem:[%s3] sm:$0xf] %vm70, %v68
    %72 = vst.msk [vmem:[%s3 + $0x4] sm:$0xf] %vm70, %v69
  $region17: #{graph_chebnet_forward.7} parent=0 // pred_fallthru
    _
  // Predicated region
  $region18: #{graph_chebnet_forward.7} parent=0 // pred_check
    _
  $region19: #{graph_chebnet_forward.7} parent=0 // pred_check_branch
    %74 = sbr.rel (0) target = $region21
  $region20: #{graph_chebnet_forward.7} parent=0 // pred_region
    _
  $region21: #{graph_chebnet_forward.7} parent=0 // pred_fallthru
    _
  // Predicated region
  $region22: #{graph_chebnet_forward.7} parent=0 // pred_check
    _
  $region23: #{graph_chebnet_forward.7} parent=0 // pred_check_branch
    %76 = sbr.rel (0) target = $region25
  $region24: #{graph_chebnet_forward.7} parent=0 // pred_region
    _
  $region25: #{graph_chebnet_forward.7} parent=0 // pred_fallthru
    _
  // Predicated region
  $region26: #{graph_chebnet_forward.7} parent=0 // pred_check
    _
  $region27: #{graph_chebnet_forward.7} parent=0 // pred_check_branch
    %78 = sbr.rel (0) target = $region29
  $region28: #{graph_chebnet_forward.7} parent=0 // pred_region
    _
  $region29: #{graph_chebnet_forward.7} parent=0 // pred_fallthru
    _
  // Predicated region
  $region30: #{graph_chebnet_forward.7} parent=0 // pred_check
    _
  $region31: #{graph_chebnet_forward.7} parent=0 // pred_check_branch
    %80 = sbr.rel (0) target = $region33
  $region32: #{graph_chebnet_forward.7} parent=0 // pred_region
    _
  $region33: #{graph_chebnet_forward.7} parent=0 // pred_fallthru
    _

// kernel: graph_chebnet_forward.6
$region0: #{graph_chebnet_forward.6}
  #allocation0 [shape = 'u32[]', space=smem, size = 0x4, offset = 0x4, fixed_abs, tag = 'smem constant byte address 0x4 - core index']
  #allocation1 [shape = 'u32[72,128]{1,0:T(1,128)}', space=vmem, size = 0x9000, scoped, tag = 'internal scratch']
  #allocation2 [shape = 'f32[32,16]{1,0:T(8,128)}', space=vmem, size = 0x4000, scoped, tag = 'scratch operand']
  %s0 = inlined_call_operand.vmem [shape: bf16[32,32], index: 0, kind: input, shape index: {}]
  %s1 = inlined_call_operand.vmem [shape: bf16[32,16], index: 1, kind: input, shape index: {}]
  %s2 = inlined_call_operand.vmem [shape: f32[32,16], index: 2, kind: input, shape index: {}]
  %s3 = inlined_call_operand.vmem [shape: f32[32,16], index: 3, kind: input, shape index: {}]
  %s4 = inlined_call_operand.vmem [shape: f32[16,32], index: 4, kind: input, shape index: {}]
  %s5 = inlined_call_operand.vmem [shape: f32[3,16,32], index: 5, kind: input, shape index: {}]
  %s6 = inlined_call_operand.vmem [shape: f32[1,32], index: 6, kind: input, shape index: {}]
  %s7 = inlined_call_operand.vmem [shape: f32[16,32], index: 7, kind: output, shape index: {}]
  %s8 = sld [smem:[#allocation0]]
  $region46: #{graph_chebnet_forward.6} parent=0
    _
  %s10 = ssub.s32 1, %s8
  %s11 = scalar_select 0, %s10, %s8
  // Predicated region
  $region2: #{graph_chebnet_forward.6} parent=0 // pred_check
    _
  $region3: #{graph_chebnet_forward.6} parent=0 // pred_check_branch
    %13 = sbr.rel (0) target = $region5
  $region4: #{graph_chebnet_forward.6} parent=0 // pred_region
    _
  $region5: #{graph_chebnet_forward.6} parent=0 // pred_fallthru
    _
  // Predicated region
  $region6: #{graph_chebnet_forward.6} parent=0 // pred_check
    _
  $region7: #{graph_chebnet_forward.6} parent=0 // pred_check_branch
    %15 = sbr.rel (0) target = $region9
  $region8: #{graph_chebnet_forward.6} parent=0 // pred_region
    _
  $region9: #{graph_chebnet_forward.6} parent=0 // pred_fallthru
    _
  // Predicated region
  $region10: #{graph_chebnet_forward.6} parent=0 // pred_check
    _
  $region11: #{graph_chebnet_forward.6} parent=0 // pred_check_branch
    %17 = sbr.rel (0) target = $region13
  $region12: #{graph_chebnet_forward.6} parent=0 // pred_region
    _
  $region13: #{graph_chebnet_forward.6} parent=0 // pred_fallthru
    _
  // Predicated region
  $region14: #{graph_chebnet_forward.6} parent=0 // pred_check
    _
  $region15: #{graph_chebnet_forward.6} parent=0 // pred_check_branch
    %19 = sbr.rel (0) target = $region17
  $region16: #{graph_chebnet_forward.6} parent=0 // pred_region
    _
  $region17: #{graph_chebnet_forward.6} parent=0 // pred_fallthru
    _
  // Predicated region
  $region18: #{graph_chebnet_forward.6} parent=0 // pred_check
    _
  $region19: #{graph_chebnet_forward.6} parent=0 // pred_check_branch
    %21 = sbr.rel (0) target = $region21
  $region20: #{graph_chebnet_forward.6} parent=0 // pred_region
    _
  $region21: #{graph_chebnet_forward.6} parent=0 // pred_fallthru
    _
  // Predicated region
  $region22: #{graph_chebnet_forward.6} parent=0 // pred_check
    _
  $region23: #{graph_chebnet_forward.6} parent=0 // pred_check_branch
    %23 = sbr.rel (0) target = $region25
  $region24: #{graph_chebnet_forward.6} parent=0 // pred_region
    _
  $region25: #{graph_chebnet_forward.6} parent=0 // pred_fallthru
    _
  // Predicated region
  $region26: #{graph_chebnet_forward.6} parent=0 // pred_check
    _
  $region27: #{graph_chebnet_forward.6} parent=0 // pred_check_branch
    %25 = sbr.rel (0) target = $region29
  $region28: #{graph_chebnet_forward.6} parent=0 // pred_region
    _
  $region29: #{graph_chebnet_forward.6} parent=0 // pred_fallthru
    _
  %p27 = scmp.eq.s32.totalorder 0, 0
  // Predicated region
  $region30: #{graph_chebnet_forward.6} parent=0 // pred_check
    %p28 = pneg %p27
  $region31: #{graph_chebnet_forward.6} parent=0 // pred_check_branch
    %30 = sbr.rel (%p28) target = $region33
  $region32: #{graph_chebnet_forward.6} parent=0 // pred_region
    %vm31 = vcmask 130048
    %32 = vst.msk [vmem:[#allocation2] sm:$0xff] %vm31, 0.0
    %33 = vst.msk [vmem:[#allocation2 + $0x8] sm:$0xff] %vm31, 0.0
    %34 = vst.msk [vmem:[#allocation2 + $0x10] sm:$0xff] %vm31, 0.0
    %35 = vst.msk [vmem:[#allocation2 + $0x18] sm:$0xff] %vm31, 0.0
  $region33: #{graph_chebnet_forward.6} parent=0 // pred_fallthru
    _
  %v36 = vld [vmem:[#allocation2] sm:$0xff]
  %v37 = vld [vmem:[#allocation2 + $0x8] sm:$0xff]
  %v38 = vld [vmem:[#allocation2 + $0x10] sm:$0xff]
  %v39 = vld [vmem:[#allocation2 + $0x18] sm:$0xff]
  %v40 = vld [vmem:[%s0] sm:$0xf]
  %v41 = vld [vmem:[%s0 + $0x4] sm:$0xf]
  %v42 = vld [vmem:[%s0 + $0x8] sm:$0xf]
  %v43 = vld [vmem:[%s0 + $0xc] sm:$0xf]
  %v44 = vld [vmem:[%s1] sm:$0xf]
  %v45 = vld [vmem:[%s1 + $0x4] sm:$0xf]
  %v46 = vld [vmem:[%s1 + $0x8] sm:$0xf]
  %v47 = vld [vmem:[%s1 + $0xc] sm:$0xf]
  %v52 = vunpack.c.l.b16 %v40
  %v53 = vunpack.c.l.b16 %v41
  %v54 = vunpack.c.l.b16 %v42
  %v55 = vunpack.c.l.b16 %v43
  %v56 = vpack.c.b16 %v53, %v52
  %v57 = vpack.c.b16 %v55, %v54
  %v62 = vunpack.c.l.b16 %v44
  %v63 = vunpack.c.l.b16 %v45
  %v64 = vunpack.c.l.b16 %v46
  %v65 = vunpack.c.l.b16 %v47
  %v66 = vpack.c.b16 %v63, %v62
  %v67 = vpack.c.b16 %v65, %v64
  %vm70 = vcmask 261120
  %v72 = vsel %vm70, %v56, 0
  %v75 = vsel %vm70, %v57, 0
  %77 = vmatpush.bf16.msra.mxu0 0
  %78 = vmatpush.bf16.msra.mxu0 0
  %79 = vmatpush.bf16.msra.mxu0 0
  %80 = vmatpush.bf16.msra.mxu0 0
  %81 = vmatpush.bf16.msra.mxu0 0
  %82 = vmatpush.bf16.msra.mxu0 0
  %83 = vmatpush.bf16.msra.mxu0 %v67
  %84 = vmatpush.bf16.msra.mxu0 %v66
  %85 = vmatmul.bf16.gmra.mxu0 %v72
  %v86 = vpop.f32.mrf.mxu0
  %v87 = vadd.f32 0.0, %v86
  %v88 = vpop.f32.mrf.mxu0
  %v89 = vadd.f32 0.0, %v88
  %90 = vmatmul.bf16.gmra.mxu0 %v75
  %v91 = vpop.f32.mrf.mxu0
  %v92 = vadd.f32 0.0, %v91
  %v93 = vpop.f32.mrf.mxu0
  %v94 = vadd.f32 0.0, %v93
  %95 = vdwg.mxu0
  %v96 = vadd.f32 %v36, %v87
  %v97 = vadd.f32 %v37, %v89
  %v98 = vadd.f32 %v38, %v92
  %v99 = vadd.f32 %v39, %v94
  %vm100 = vcmask 130048
  %101 = vst.msk [vmem:[#allocation2] sm:$0xff] %vm100, %v96
  %102 = vst.msk [vmem:[#allocation2 + $0x8] sm:$0xff] %vm100, %v97
  %103 = vst.msk [vmem:[#allocation2 + $0x10] sm:$0xff] %vm100, %v98
  %104 = vst.msk [vmem:[#allocation2 + $0x18] sm:$0xff] %vm100, %v99
  // Predicated region
  $region34: #{graph_chebnet_forward.6} parent=0 // pred_check
    %p105 = pneg %p27
  $region35: #{graph_chebnet_forward.6} parent=0 // pred_check_branch
    %107 = sbr.rel (%p105) target = $region37
  $region36: #{graph_chebnet_forward.6} parent=0 // pred_region
    %v108 = vld [vmem:[#allocation2] sm:$0xff]
    %v109 = vld [vmem:[#allocation2 + $0x8] sm:$0xff]
    %v110 = vld [vmem:[#allocation2 + $0x10] sm:$0xff]
    %v111 = vld [vmem:[#allocation2 + $0x18] sm:$0xff]
    %v112 = vmul.f32 %v108, 2.0
    %v113 = vmul.f32 %v109, 2.0
    %v114 = vmul.f32 %v110, 2.0
    %v115 = vmul.f32 %v111, 2.0
    %v116 = vld [vmem:[%s2] sm:$0xff]
    %v117 = vld [vmem:[%s2 + $0x8] sm:$0xff]
    %v118 = vld [vmem:[%s2 + $0x10] sm:$0xff]
    %v119 = vld [vmem:[%s2 + $0x18] sm:$0xff]
    %v120 = vsub.f32 %v112, %v116
    %v121 = vsub.f32 %v113, %v117
    %v122 = vsub.f32 %v114, %v118
    %v123 = vsub.f32 %v115, %v119
    %s124 = scalar_lea.vmem %s5, 32
    %v125 = vld [vmem:[%s124] sm:$0xff]
    %v126 = vld [vmem:[%s124 + $0x8] sm:$0xff]
    %v127 = vld [vmem:[%s5] sm:$0xff]
    %v128 = vld [vmem:[%s5 + $0x8] sm:$0xff]
    %v130 = vsel %vm100, %v116, 0
    %v133 = vsel %vm100, %v117, 0
    %v136 = vsel %vm100, %v118, 0
    %v139 = vsel %vm100, %v119, 0
    %141 = vmatpush.msra.mxu0 0.0
    %142 = vmatpush.msra.mxu0 0.0
    %143 = vmatpush.msra.mxu0 0.0
    %144 = vmatpush.msra.mxu0 0.0
    %145 = vmatpush.msra.mxu0 0.0
    %146 = vmatpush.msra.mxu0 0.0
    %147 = vmatpush.msra.mxu0 0.0
    %148 = vmatpush.msra.mxu0 0.0
    %149 = vmatpush.msra.mxu0 0.0
    %150 = vmatpush.msra.mxu0 0.0
    %151 = vmatpush.msra.mxu0 0.0
    %152 = vmatpush.msra.mxu0 0.0
    %153 = vmatpush.msra.mxu0 0.0
    %154 = vmatpush.msra.mxu0 0.0
    %155 = vmatpush.msra.mxu0 %v128
    %156 = vmatpush.msra.mxu0 %v127
    %157 = vmatmul.f32.gmra.mxu0 %v130
    %v158 = vpop.f32.mrf.mxu0
    %v159 = vadd.f32 0.0, %v158
    %160 = vmatmul.f32.gmra.mxu0 %v133
    %v161 = vpop.f32.mrf.mxu0
    %v162 = vadd.f32 0.0, %v161
    %163 = vmatmul.f32.gmra.mxu0 %v136
    %v164 = vpop.f32.mrf.mxu0
    %v165 = vadd.f32 0.0, %v164
    %166 = vmatmul.f32.gmra.mxu0 %v139
    %v167 = vpop.f32.mrf.mxu0
    %v168 = vadd.f32 0.0, %v167
    %169 = vdwg.mxu0
    %v171 = vsel %vm100, %v120, 0
    %v174 = vsel %vm100, %v121, 0
    %v177 = vsel %vm100, %v122, 0
    %v180 = vsel %vm100, %v123, 0
    %182 = vmatpush.msra.mxu0 0.0
    %183 = vmatpush.msra.mxu0 0.0
    %184 = vmatpush.msra.mxu0 0.0
    %185 = vmatpush.msra.mxu0 0.0
    %186 = vmatpush.msra.mxu0 0.0
    %187 = vmatpush.msra.mxu0 0.0
    %188 = vmatpush.msra.mxu0 0.0
    %189 = vmatpush.msra.mxu0 0.0
    %190 = vmatpush.msra.mxu0 0.0
    %191 = vmatpush.msra.mxu0 0.0
    %192 = vmatpush.msra.mxu0 0.0
    %193 = vmatpush.msra.mxu0 0.0
    %194 = vmatpush.msra.mxu0 0.0
    %195 = vmatpush.msra.mxu0 0.0
    %196 = vmatpush.msra.mxu0 %v126
    %197 = vmatpush.msra.mxu0 %v125
    %198 = vmatmul.f32.gmra.mxu0 %v171
    %v199 = vpop.f32.mrf.mxu0
    %v200 = vadd.f32 %v159, %v199
    %201 = vmatmul.f32.gmra.mxu0 %v174
    %v202 = vpop.f32.mrf.mxu0
    %v203 = vadd.f32 %v162, %v202
    %204 = vmatmul.f32.gmra.mxu0 %v177
    %v205 = vpop.f32.mrf.mxu0
    %v206 = vadd.f32 %v165, %v205
    %207 = vmatmul.f32.gmra.mxu0 %v180
    %v208 = vpop.f32.mrf.mxu0
    %v209 = vadd.f32 %v168, %v208
    %210 = vdwg.mxu0
    %v211 = vld [vmem:[%s3] sm:$0xff]
    %v212 = vld [vmem:[%s3 + $0x8] sm:$0xff]
    %v213 = vld [vmem:[%s3 + $0x10] sm:$0xff]
    %v214 = vld [vmem:[%s3 + $0x18] sm:$0xff]
    %s215 = scalar_lea.vmem %s5, 16
    %v216 = vld [vmem:[%s215] sm:$0xff]
    %v217 = vld [vmem:[%s215 + $0x8] sm:$0xff]
    %v219 = vsel %vm100, %v211, 0
    %v222 = vsel %vm100, %v212, 0
    %v225 = vsel %vm100, %v213, 0
    %v228 = vsel %vm100, %v214, 0
    %230 = vmatpush.msra.mxu0 0.0
    %231 = vmatpush.msra.mxu0 0.0
    %232 = vmatpush.msra.mxu0 0.0
    %233 = vmatpush.msra.mxu0 0.0
    %234 = vmatpush.msra.mxu0 0.0
    %235 = vmatpush.msra.mxu0 0.0
    %236 = vmatpush.msra.mxu0 0.0
    %237 = vmatpush.msra.mxu0 0.0
    %238 = vmatpush.msra.mxu0 0.0
    %239 = vmatpush.msra.mxu0 0.0
    %240 = vmatpush.msra.mxu0 0.0
    %241 = vmatpush.msra.mxu0 0.0
    %242 = vmatpush.msra.mxu0 0.0
    %243 = vmatpush.msra.mxu0 0.0
    %244 = vmatpush.msra.mxu0 %v217
    %245 = vmatpush.msra.mxu0 %v216
    %246 = vmatmul.f32.gmra.mxu0 %v219
    %v247 = vpop.f32.mrf.mxu0
    %v248 = vadd.f32 0.0, %v247
    %249 = vmatmul.f32.gmra.mxu0 %v222
    %v250 = vpop.f32.mrf.mxu0
    %v251 = vadd.f32 0.0, %v250
    %252 = vmatmul.f32.gmra.mxu0 %v225
    %v253 = vpop.f32.mrf.mxu0
    %v254 = vadd.f32 0.0, %v253
    %255 = vmatmul.f32.gmra.mxu0 %v228
    %v256 = vpop.f32.mrf.mxu0
    %v257 = vadd.f32 0.0, %v256
    %258 = vdwg.mxu0
    %v259 = vadd.f32 %v200, %v248
    %v260 = vadd.f32 %v203, %v251
    %v261 = vadd.f32 %v206, %v254
    %v262 = vadd.f32 %v209, %v257
    %v263 = vld [vmem:[%s6] sm:$0x1]
    %v265 = vperm.slane %v263, 0
    %v267 = vadd.f32 %v259, %v265
    %v268 = vadd.f32 %v260, %v265
    %v269 = vadd.f32 %v261, %v265
    %v270 = vadd.f32 %v262, %v265
    %v271 = vmax.f32 %v267, 0.0
    %v272 = vmax.f32 %v268, 0.0
    %v273 = vmax.f32 %v269, 0.0
    %v274 = vmax.f32 %v270, 0.0
    %v275 = vld [vmem:[%s4] sm:$0xff]
    %v276 = vld [vmem:[%s4 + $0x8] sm:$0xff]
    %v278 = vsel %vm70, %v275, 0
    %v281 = vsel %vm70, %v276, 0
    %283 = vmatpush.msra.mxu0 0.0
    %284 = vmatpush.msra.mxu0 0.0
    %285 = vmatpush.msra.mxu0 0.0
    %286 = vmatpush.msra.mxu0 0.0
    %287 = vmatpush.msra.mxu0 0.0
    %288 = vmatpush.msra.mxu0 0.0
    %289 = vmatpush.msra.mxu0 0.0
    %290 = vmatpush.msra.mxu0 0.0
    %291 = vmatpush.msra.mxu0 0.0
    %292 = vmatpush.msra.mxu0 0.0
    %293 = vmatpush.msra.mxu0 0.0
    %294 = vmatpush.msra.mxu0 0.0
    %295 = vmatpush.msra.mxu0 %v274
    %296 = vmatpush.msra.mxu0 %v273
    %297 = vmatpush.msra.mxu0 %v272
    %298 = vmatpush.msra.mxu0 %v271
    %299 = vmatmul.f32.gmra.mxu0 %v278
    %v300 = vpop.f32.mrf.mxu0
    %v301 = vadd.f32 0.0, %v300
    %302 = vmatmul.f32.gmra.mxu0 %v281
    %v303 = vpop.f32.mrf.mxu0
    %v304 = vadd.f32 0.0, %v303
    %305 = vdwg.mxu0
    %306 = vst.msk [vmem:[%s7] sm:$0xff] %vm70, %v301
    %307 = vst.msk [vmem:[%s7 + $0x8] sm:$0xff] %vm70, %v304
  $region37: #{graph_chebnet_forward.6} parent=0 // pred_fallthru
    _
  // Predicated region
  $region38: #{graph_chebnet_forward.6} parent=0 // pred_check
    _
  $region39: #{graph_chebnet_forward.6} parent=0 // pred_check_branch
    %309 = sbr.rel (0) target = $region41
  $region40: #{graph_chebnet_forward.6} parent=0 // pred_region
    _
  $region41: #{graph_chebnet_forward.6} parent=0 // pred_fallthru
    _
  // Predicated region
  $region42: #{graph_chebnet_forward.6} parent=0 // pred_check
    _
  $region43: #{graph_chebnet_forward.6} parent=0 // pred_check_branch
    %311 = sbr.rel (0) target = $region45
  $region44: #{graph_chebnet_forward.6} parent=0 // pred_region
    _
  $region45: #{graph_chebnet_forward.6} parent=0 // pred_fallthru
    _

// kernel: graph_chebnet_forward.9
$region0: #{graph_chebnet_forward.9}
  #allocation0 [shape = 'u32[]', space=smem, size = 0x4, offset = 0x4, fixed_abs, tag = 'smem constant byte address 0x4 - core index']
  #allocation1 [shape = 'u32[72,128]{1,0:T(1,128)}', space=vmem, size = 0x9000, scoped, tag = 'internal scratch']
  #allocation2 [shape = 'f32[2,32]{1,0:T(2,128)}', space=vmem, size = 0x400, scoped, tag = 'scratch operand']
  %s0 = inlined_call_operand.vmem [shape: f32[2,16], index: 0, kind: input, shape index: {}]
  %s1 = inlined_call_operand.vmem [shape: f32[16,32], index: 1, kind: input, shape index: {}]
  %s2 = inlined_call_operand.vmem [shape: f32[32,8], index: 2, kind: input, shape index: {}]
  %s3 = inlined_call_operand.vmem [shape: f32[1,8], index: 3, kind: input, shape index: {}]
  %s4 = inlined_call_operand.hbm [shape: f32[2,8], index: 4, kind: output, shape index: {}]
  %s5 = sld [smem:[#allocation0]]
  $region34: #{graph_chebnet_forward.9} parent=0
    _
  %s7 = ssub.s32 1, %s5
  %s8 = scalar_select 0, %s7, %s5
  $region1: #{graph_chebnet_forward.9} parent=0
    #allocation3 [shape = 'u8[1024]{0}', space=vmem, size = 0x400, scoped, tag = 'output window, operand 0, single buffered']
    #allocation4 [shape = 's32[1]{0}', space=sflag, size = 0x4, scoped, tag = 'scoped memory for graph_chebnet_forward.9']
    %9 = vsyncpa [#allocation4], 0
    // Predicated region
    $region2: #{graph_chebnet_forward.9} parent=1 // pred_check
      _
    $region3: #{graph_chebnet_forward.9} parent=1 // pred_check_branch
      %11 = sbr.rel (0) target = $region5
    $region4: #{graph_chebnet_forward.9} parent=1 // pred_region
      _
    $region5: #{graph_chebnet_forward.9} parent=1 // pred_fallthru
      _
    // Predicated region
    $region6: #{graph_chebnet_forward.9} parent=1 // pred_check
      _
    $region7: #{graph_chebnet_forward.9} parent=1 // pred_check_branch
      %13 = sbr.rel (0) target = $region9
    $region8: #{graph_chebnet_forward.9} parent=1 // pred_region
      _
    $region9: #{graph_chebnet_forward.9} parent=1 // pred_fallthru
      _
    // Predicated region
    $region10: #{graph_chebnet_forward.9} parent=1 // pred_check
      _
    $region11: #{graph_chebnet_forward.9} parent=1 // pred_check_branch
      %15 = sbr.rel (0) target = $region13
    $region12: #{graph_chebnet_forward.9} parent=1 // pred_region
      _
    $region13: #{graph_chebnet_forward.9} parent=1 // pred_fallthru
      _
    // Predicated region
    $region14: #{graph_chebnet_forward.9} parent=1 // pred_check
      _
    $region15: #{graph_chebnet_forward.9} parent=1 // pred_check_branch
      %17 = sbr.rel (0) target = $region17
    $region16: #{graph_chebnet_forward.9} parent=1 // pred_region
      _
    $region17: #{graph_chebnet_forward.9} parent=1 // pred_fallthru
      _
    %p18 = scmp.eq.s32.totalorder 0, 0
    // Predicated region
    $region18: #{graph_chebnet_forward.9} parent=1 // pred_check
      %p19 = pneg %p18
    $region19: #{graph_chebnet_forward.9} parent=1 // pred_check_branch
      %21 = sbr.rel (%p19) target = $region21
    $region20: #{graph_chebnet_forward.9} parent=1 // pred_region
      %vm22 = vcmask 254976
      %23 = vst.msk [vmem:[#allocation2] sm:$0x3] %vm22, 0.0
    $region21: #{graph_chebnet_forward.9} parent=1 // pred_fallthru
      _
    %v24 = vld [vmem:[#allocation2] sm:$0x3]
    %v25 = vld [vmem:[%s0] sm:$0x3]
    %v26 = vld [vmem:[%s1] sm:$0xff]
    %v27 = vld [vmem:[%s1 + $0x8] sm:$0xff]
    %vm28 = vcmask 130048
    %v30 = vsel %vm28, %v25, 0
    %32 = vmatpush.msra.mxu0 0.0
    %33 = vmatpush.msra.mxu0 0.0
    %34 = vmatpush.msra.mxu0 0.0
    %35 = vmatpush.msra.mxu0 0.0
    %36 = vmatpush.msra.mxu0 0.0
    %37 = vmatpush.msra.mxu0 0.0
    %38 = vmatpush.msra.mxu0 0.0
    %39 = vmatpush.msra.mxu0 0.0
    %40 = vmatpush.msra.mxu0 0.0
    %41 = vmatpush.msra.mxu0 0.0
    %42 = vmatpush.msra.mxu0 0.0
    %43 = vmatpush.msra.mxu0 0.0
    %44 = vmatpush.msra.mxu0 0.0
    %45 = vmatpush.msra.mxu0 0.0
    %46 = vmatpush.msra.mxu0 %v27
    %47 = vmatpush.msra.mxu0 %v26
    %48 = vmatmul.f32.gmra.mxu0 %v30
    %v49 = vpop.f32.mrf.mxu0
    %v50 = vadd.f32 0.0, %v49
    %51 = vdwg.mxu0
    %v52 = vadd.f32 %v24, %v50
    %vm53 = vcmask 254976
    %54 = vst.msk [vmem:[#allocation2] sm:$0x3] %vm53, %v52
    // Predicated region
    $region22: #{graph_chebnet_forward.9} parent=1 // pred_check
      %p55 = pneg %p18
    $region23: #{graph_chebnet_forward.9} parent=1 // pred_check_branch
      %57 = sbr.rel (%p55) target = $region25
    $region24: #{graph_chebnet_forward.9} parent=1 // pred_region
      %v58 = vld [vmem:[#allocation2] sm:$0x3]
      %v59 = vld [vmem:[%s2] sm:$0xff]
      %v60 = vld [vmem:[%s2 + $0x8] sm:$0xff]
      %v61 = vld [vmem:[%s2 + $0x10] sm:$0xff]
      %v62 = vld [vmem:[%s2 + $0x18] sm:$0xff]
      %v63 = vld [vmem:[%s3] sm:$0x1]
      %v65 = vperm.slane %v63, 0
      %vm67 = vcmask 261120
      %v69 = vsel %vm67, %v58, 0
      %71 = vmatpush.msra.mxu0 0.0
      %72 = vmatpush.msra.mxu0 0.0
      %73 = vmatpush.msra.mxu0 0.0
      %74 = vmatpush.msra.mxu0 0.0
      %75 = vmatpush.msra.mxu0 0.0
      %76 = vmatpush.msra.mxu0 0.0
      %77 = vmatpush.msra.mxu0 0.0
      %78 = vmatpush.msra.mxu0 0.0
      %79 = vmatpush.msra.mxu0 0.0
      %80 = vmatpush.msra.mxu0 0.0
      %81 = vmatpush.msra.mxu0 0.0
      %82 = vmatpush.msra.mxu0 0.0
      %83 = vmatpush.msra.mxu0 %v62
      %84 = vmatpush.msra.mxu0 %v61
      %85 = vmatpush.msra.mxu0 %v60
      %86 = vmatpush.msra.mxu0 %v59
      %87 = vmatmul.f32.gmra.mxu0 %v69
      %v88 = vpop.f32.mrf.mxu0
      %v89 = vadd.f32 %v65, %v88
      %90 = vdwg.mxu0
      %vm91 = vcmask 58368
      %v92 = vsel %vm91, %v89, -inf
      %93 = vmax.xlane.f32.xlu0 %v92
      %v94 = vpop.xlane.xlu0 %93
      %v95 = vsub.f32 %v89, %v94
      %v96 = vmul.f32 %v95, 1.442695
      %v97 = vpow.pop %v96
      %v98 = vsel %vm91, %v97, 0.0
      %99 = vadd.xlane.f32.xlu0 %v98
      %v100 = vpop.xlane.xlu0 %99
      %v101 = vlog2.pop %v100
      %v102 = vmul.f32 %v101, 0.6931472
      %v103 = vsub.f32 %v95, %v102
      %104 = vst.msk [vmem:[#allocation3] sm:$0x3] %vm91, %v103
    $region25: #{graph_chebnet_forward.9} parent=1 // pred_fallthru
      _
    // Predicated region
    $region26: #{graph_chebnet_forward.9} parent=1 // pred_check
      _
    $region27: #{graph_chebnet_forward.9} parent=1 // pred_check_branch
      %106 = sbr.rel (0) target = $region29
    $region28: #{graph_chebnet_forward.9} parent=1 // pred_region
      %108 = vsyncadd [#allocation4], 0
      %s110 = sshll.u32 [#allocation3], 4
      %s111 = int_to_ptr.vmem [resolvable:$true] %s110
      %s112 = sshll.u32 %s4, 4
      %s113 = int_to_ptr.hbm [resolvable:$true] %s112
      %115 = dma.vmem_to_hbm [thread:$0]  %s111, 32, %s113, [#allocation4]
    $region29: #{graph_chebnet_forward.9} parent=1 // pred_fallthru
      _
    // Predicated region
    $region30: #{graph_chebnet_forward.9} parent=1 // pred_check
      _
    $region31: #{graph_chebnet_forward.9} parent=1 // pred_check_branch
      %117 = sbr.rel (0) target = $region33
    $region32: #{graph_chebnet_forward.9} parent=1 // pred_region
      %119 = dma.done [#allocation4], 32
    $region33: #{graph_chebnet_forward.9} parent=1 // pred_fallthru
      _
    %120 = vsyncpa [#allocation4], 1

// kernel: graph_chebnet_forward.8
$region0: #{graph_chebnet_forward.8}
  #allocation0 [shape = 'u32[]', space=smem, size = 0x4, offset = 0x4, fixed_abs, tag = 'smem constant byte address 0x4 - core index']
  #allocation1 [shape = 'u32[72,128]{1,0:T(1,128)}', space=vmem, size = 0x9000, scoped, tag = 'internal scratch']
  #allocation2 [shape = 'f32[16,32]{1,0:T(8,128)}', space=vmem, size = 0x2000, scoped, tag = 'scratch operand']
  %s0 = inlined_call_operand.vmem [shape: bf16[16,16], index: 0, kind: input, shape index: {}]
  %s1 = inlined_call_operand.vmem [shape: bf16[16,32], index: 1, kind: input, shape index: {}]
  %s2 = inlined_call_operand.vmem [shape: f32[16,32], index: 2, kind: input, shape index: {}]
  %s3 = inlined_call_operand.vmem [shape: f32[16,32], index: 3, kind: input, shape index: {}]
  %s4 = inlined_call_operand.vmem [shape: f32[3,32,32], index: 4, kind: input, shape index: {}]
  %s5 = inlined_call_operand.vmem [shape: f32[1,32], index: 5, kind: input, shape index: {}]
  %s6 = inlined_call_operand.vmem [shape: f32[16,32], index: 6, kind: output, shape index: {}]
  %s7 = sld [smem:[#allocation0]]
  $region42: #{graph_chebnet_forward.8} parent=0
    _
  %s9 = ssub.s32 1, %s7
  %s10 = scalar_select 0, %s9, %s7
  // Predicated region
  $region2: #{graph_chebnet_forward.8} parent=0 // pred_check
    _
  $region3: #{graph_chebnet_forward.8} parent=0 // pred_check_branch
    %12 = sbr.rel (0) target = $region5
  $region4: #{graph_chebnet_forward.8} parent=0 // pred_region
    _
  $region5: #{graph_chebnet_forward.8} parent=0 // pred_fallthru
    _
  // Predicated region
  $region6: #{graph_chebnet_forward.8} parent=0 // pred_check
    _
  $region7: #{graph_chebnet_forward.8} parent=0 // pred_check_branch
    %14 = sbr.rel (0) target = $region9
  $region8: #{graph_chebnet_forward.8} parent=0 // pred_region
    _
  $region9: #{graph_chebnet_forward.8} parent=0 // pred_fallthru
    _
  // Predicated region
  $region10: #{graph_chebnet_forward.8} parent=0 // pred_check
    _
  $region11: #{graph_chebnet_forward.8} parent=0 // pred_check_branch
    %16 = sbr.rel (0) target = $region13
  $region12: #{graph_chebnet_forward.8} parent=0 // pred_region
    _
  $region13: #{graph_chebnet_forward.8} parent=0 // pred_fallthru
    _
  // Predicated region
  $region14: #{graph_chebnet_forward.8} parent=0 // pred_check
    _
  $region15: #{graph_chebnet_forward.8} parent=0 // pred_check_branch
    %18 = sbr.rel (0) target = $region17
  $region16: #{graph_chebnet_forward.8} parent=0 // pred_region
    _
  $region17: #{graph_chebnet_forward.8} parent=0 // pred_fallthru
    _
  // Predicated region
  $region18: #{graph_chebnet_forward.8} parent=0 // pred_check
    _
  $region19: #{graph_chebnet_forward.8} parent=0 // pred_check_branch
    %20 = sbr.rel (0) target = $region21
  $region20: #{graph_chebnet_forward.8} parent=0 // pred_region
    _
  $region21: #{graph_chebnet_forward.8} parent=0 // pred_fallthru
    _
  // Predicated region
  $region22: #{graph_chebnet_forward.8} parent=0 // pred_check
    _
  $region23: #{graph_chebnet_forward.8} parent=0 // pred_check_branch
    %22 = sbr.rel (0) target = $region25
  $region24: #{graph_chebnet_forward.8} parent=0 // pred_region
    _
  $region25: #{graph_chebnet_forward.8} parent=0 // pred_fallthru
    _
  %p24 = scmp.eq.s32.totalorder 0, 0
  // Predicated region
  $region26: #{graph_chebnet_forward.8} parent=0 // pred_check
    %p25 = pneg %p24
  $region27: #{graph_chebnet_forward.8} parent=0 // pred_check_branch
    %27 = sbr.rel (%p25) target = $region29
  $region28: #{graph_chebnet_forward.8} parent=0 // pred_region
    %vm28 = vcmask 261120
    %29 = vst.msk [vmem:[#allocation2] sm:$0xff] %vm28, 0.0
    %30 = vst.msk [vmem:[#allocation2 + $0x8] sm:$0xff] %vm28, 0.0
  $region29: #{graph_chebnet_forward.8} parent=0 // pred_fallthru
    _
  %v31 = vld [vmem:[#allocation2] sm:$0xff]
  %v32 = vld [vmem:[#allocation2 + $0x8] sm:$0xff]
  %v33 = vld [vmem:[%s0] sm:$0xf]
  %v34 = vld [vmem:[%s0 + $0x4] sm:$0xf]
  %v35 = vld [vmem:[%s1] sm:$0xf]
  %v36 = vld [vmem:[%s1 + $0x4] sm:$0xf]
  %v39 = vunpack.c.l.b16 %v33
  %v40 = vunpack.c.l.b16 %v34
  %v41 = vpack.c.b16 %v40, %v39
  %v44 = vunpack.c.l.b16 %v35
  %v45 = vunpack.c.l.b16 %v36
  %v46 = vpack.c.b16 %v45, %v44
  %vm48 = vcmask 130048
  %v50 = vsel %vm48, %v41, 0
  %52 = vmatpush.bf16.msra.mxu0 0
  %53 = vmatpush.bf16.msra.mxu0 0
  %54 = vmatpush.bf16.msra.mxu0 0
  %55 = vmatpush.bf16.msra.mxu0 0
  %56 = vmatpush.bf16.msra.mxu0 0
  %57 = vmatpush.bf16.msra.mxu0 0
  %58 = vmatpush.bf16.msra.mxu0 0
  %59 = vmatpush.bf16.msra.mxu0 %v46
  %60 = vmatmul.bf16.gmra.mxu0 %v50
  %v61 = vpop.f32.mrf.mxu0
  %v62 = vadd.f32 0.0, %v61
  %v63 = vpop.f32.mrf.mxu0
  %v64 = vadd.f32 0.0, %v63
  %65 = vdwg.mxu0
  %v66 = vadd.f32 %v31, %v62
  %v67 = vadd.f32 %v32, %v64
  %vm68 = vcmask 261120
  %69 = vst.msk [vmem:[#allocation2] sm:$0xff] %vm68, %v66
  %70 = vst.msk [vmem:[#allocation2 + $0x8] sm:$0xff] %vm68, %v67
  // Predicated region
  $region30: #{graph_chebnet_forward.8} parent=0 // pred_check
    %p71 = pneg %p24
  $region31: #{graph_chebnet_forward.8} parent=0 // pred_check_branch
    %73 = sbr.rel (%p71) target = $region33
  $region32: #{graph_chebnet_forward.8} parent=0 // pred_region
    %v74 = vld [vmem:[#allocation2] sm:$0xff]
    %v75 = vld [vmem:[#allocation2 + $0x8] sm:$0xff]
    %v76 = vmul.f32 %v74, 2.0
    %v77 = vmul.f32 %v75, 2.0
    %v78 = vld [vmem:[%s2] sm:$0xff]
    %v79 = vld [vmem:[%s2 + $0x8] sm:$0xff]
    %v80 = vsub.f32 %v76, %v78
    %v81 = vsub.f32 %v77, %v79
    %s82 = scalar_lea.vmem %s4, 64
    %v83 = vld [vmem:[%s82] sm:$0xff]
    %v84 = vld [vmem:[%s82 + $0x8] sm:$0xff]
    %v85 = vld [vmem:[%s82 + $0x10] sm:$0xff]
    %v86 = vld [vmem:[%s82 + $0x18] sm:$0xff]
    %v87 = vld [vmem:[%s4] sm:$0xff]
    %v88 = vld [vmem:[%s4 + $0x8] sm:$0xff]
    %v89 = vld [vmem:[%s4 + $0x10] sm:$0xff]
    %v90 = vld [vmem:[%s4 + $0x18] sm:$0xff]
    %v92 = vsel %vm68, %v78, 0
    %v95 = vsel %vm68, %v79, 0
    %97 = vmatpush.msra.mxu0 0.0
    %98 = vmatpush.msra.mxu0 0.0
    %99 = vmatpush.msra.mxu0 0.0
    %100 = vmatpush.msra.mxu0 0.0
    %101 = vmatpush.msra.mxu0 0.0
    %102 = vmatpush.msra.mxu0 0.0
    %103 = vmatpush.msra.mxu0 0.0
    %104 = vmatpush.msra.mxu0 0.0
    %105 = vmatpush.msra.mxu0 0.0
    %106 = vmatpush.msra.mxu0 0.0
    %107 = vmatpush.msra.mxu0 0.0
    %108 = vmatpush.msra.mxu0 0.0
    %109 = vmatpush.msra.mxu0 %v90
    %110 = vmatpush.msra.mxu0 %v89
    %111 = vmatpush.msra.mxu0 %v88
    %112 = vmatpush.msra.mxu0 %v87
    %113 = vmatmul.f32.gmra.mxu0 %v92
    %v114 = vpop.f32.mrf.mxu0
    %v115 = vadd.f32 0.0, %v114
    %116 = vmatmul.f32.gmra.mxu0 %v95
    %v117 = vpop.f32.mrf.mxu0
    %v118 = vadd.f32 0.0, %v117
    %119 = vdwg.mxu0
    %v121 = vsel %vm68, %v80, 0
    %v124 = vsel %vm68, %v81, 0
    %126 = vmatpush.msra.mxu0 0.0
    %127 = vmatpush.msra.mxu0 0.0
    %128 = vmatpush.msra.mxu0 0.0
    %129 = vmatpush.msra.mxu0 0.0
    %130 = vmatpush.msra.mxu0 0.0
    %131 = vmatpush.msra.mxu0 0.0
    %132 = vmatpush.msra.mxu0 0.0
    %133 = vmatpush.msra.mxu0 0.0
    %134 = vmatpush.msra.mxu0 0.0
    %135 = vmatpush.msra.mxu0 0.0
    %136 = vmatpush.msra.mxu0 0.0
    %137 = vmatpush.msra.mxu0 0.0
    %138 = vmatpush.msra.mxu0 %v86
    %139 = vmatpush.msra.mxu0 %v85
    %140 = vmatpush.msra.mxu0 %v84
    %141 = vmatpush.msra.mxu0 %v83
    %142 = vmatmul.f32.gmra.mxu0 %v121
    %v143 = vpop.f32.mrf.mxu0
    %v144 = vadd.f32 %v115, %v143
    %145 = vmatmul.f32.gmra.mxu0 %v124
    %v146 = vpop.f32.mrf.mxu0
    %v147 = vadd.f32 %v118, %v146
    %148 = vdwg.mxu0
    %v149 = vld [vmem:[%s3] sm:$0xff]
    %v150 = vld [vmem:[%s3 + $0x8] sm:$0xff]
    %s151 = scalar_lea.vmem %s4, 32
    %v152 = vld [vmem:[%s151] sm:$0xff]
    %v153 = vld [vmem:[%s151 + $0x8] sm:$0xff]
    %v154 = vld [vmem:[%s151 + $0x10] sm:$0xff]
    %v155 = vld [vmem:[%s151 + $0x18] sm:$0xff]
    %v157 = vsel %vm68, %v149, 0
    %v160 = vsel %vm68, %v150, 0
    %162 = vmatpush.msra.mxu0 0.0
    %163 = vmatpush.msra.mxu0 0.0
    %164 = vmatpush.msra.mxu0 0.0
    %165 = vmatpush.msra.mxu0 0.0
    %166 = vmatpush.msra.mxu0 0.0
    %167 = vmatpush.msra.mxu0 0.0
    %168 = vmatpush.msra.mxu0 0.0
    %169 = vmatpush.msra.mxu0 0.0
    %170 = vmatpush.msra.mxu0 0.0
    %171 = vmatpush.msra.mxu0 0.0
    %172 = vmatpush.msra.mxu0 0.0
    %173 = vmatpush.msra.mxu0 0.0
    %174 = vmatpush.msra.mxu0 %v155
    %175 = vmatpush.msra.mxu0 %v154
    %176 = vmatpush.msra.mxu0 %v153
    %177 = vmatpush.msra.mxu0 %v152
    %178 = vmatmul.f32.gmra.mxu0 %v157
    %v179 = vpop.f32.mrf.mxu0
    %v180 = vadd.f32 0.0, %v179
    %181 = vmatmul.f32.gmra.mxu0 %v160
    %v182 = vpop.f32.mrf.mxu0
    %v183 = vadd.f32 0.0, %v182
    %184 = vdwg.mxu0
    %v185 = vadd.f32 %v144, %v180
    %v186 = vadd.f32 %v147, %v183
    %v187 = vld [vmem:[%s5] sm:$0x1]
    %v189 = vperm.slane %v187, 0
    %v191 = vadd.f32 %v185, %v189
    %v192 = vadd.f32 %v186, %v189
    %v193 = vmax.f32 %v191, 0.0
    %v194 = vmax.f32 %v192, 0.0
    %195 = vst.msk [vmem:[%s6] sm:$0xff] %vm68, %v193
    %196 = vst.msk [vmem:[%s6 + $0x8] sm:$0xff] %vm68, %v194
  $region33: #{graph_chebnet_forward.8} parent=0 // pred_fallthru
    _
  // Predicated region
  $region34: #{graph_chebnet_forward.8} parent=0 // pred_check
    _
  $region35: #{graph_chebnet_forward.8} parent=0 // pred_check_branch
    %198 = sbr.rel (0) target = $region37
  $region36: #{graph_chebnet_forward.8} parent=0 // pred_region
    _
  $region37: #{graph_chebnet_forward.8} parent=0 // pred_fallthru
    _
  // Predicated region
  $region38: #{graph_chebnet_forward.8} parent=0 // pred_check
    _
  $region39: #{graph_chebnet_forward.8} parent=0 // pred_check_branch
    %200 = sbr.rel (0) target = $region41
  $region40: #{graph_chebnet_forward.8} parent=0 // pred_region
    _
  $region41: #{graph_chebnet_forward.8} parent=0 // pred_fallthru
    _

</llo_original>
